<compile_context>
chip_gen: v5e
topology: v5e:2x2
jax: 0.10.0
libtpu: 0.0.40
codegen_flags: <defaults>
</compile_context>

<pallas_src>
import functools

import jax
import jax.numpy as jnp
from jax.experimental import pallas as pl
from jax.experimental.pallas import tpu as pltpu


def _round_up(v, m):
    return (v + m - 1) // m * m


def _pick_tile(limit, total):
    """Largest multiple of 128 that is <= min(limit, total) and divides total."""
    t = min(limit, total)
    t -= t % 128
    t = max(t, 128)
    while total % t != 0:
        t -= 128
    return t


def _vmem_cap_bytes():
    """Physical-VMEM-aware scoped limit cap (leave compiler headroom)."""
    try:
        kind = jax.devices()[0].device_kind.lower()
    except Exception:  # pragma: no cover
        kind = ""
    if "v7" in kind or "7x" in kind:
        phys = 64 * 1024 * 1024        # v7x
    else:
        phys = 128 * 1024 * 1024       # v5e / v6e
    return phys - 8 * 1024 * 1024      # headroom for compiler-internal scratch


# ----------------------------- fused Pallas kernel ---------------------------

def _fused_gin_kernel(eps_ref, a_ref, x0_hbm, w_ref, b_ref, wout_ref, bout_ref,
                      emb_hbm, logits_hbm, probs_hbm,
                      x_buf, acc_ref, logit_buf, prob_buf,
                      *, num_classes, normalize):
    """Grid = (L, N/TM, N/TK).

    Each grid step accumulates one (TM, TK) adjacency tile into the aggregation
    accumulator.  At k == last, the GIN layer update (self term, Linear+ReLU,
    optional L2 normalize) is applied and the new features are written into the
    other slot of the double-buffered bf16 VMEM feature state.  At the last layer
    the embedding, logits and softmax probabilities for this row tile are DMA'd
    straight to their HBM outputs.
    """
    l = pl.program_id(0)
    i = pl.program_id(1)
    k = pl.program_id(2)
    num_layers = pl.num_programs(0)
    nk = pl.num_programs(2)

    tm = acc_ref.shape[0]
    tk = a_ref.shape[1]

    # One-time: DMA the (padded, bf16) layer-0 features from HBM into slot 0 of
    # the feature-state scratch.  x0 is *not* a pipelined BlockSpec input, so it
    # costs no resident double-buffered VMEM.
    @pl.when((l == 0) & (i == 0) & (k == 0))
    def _():
        pltpu.sync_copy(x0_hbm, x_buf.at[0])

    # Zero the aggregation accumulator at the start of every k-reduction.
    @pl.when(k == 0)
    def _():
        acc_ref[...] = jnp.zeros_like(acc_ref)

    read_slot = l % 2

    # Neighbor sum aggregation: acc += A[i-tile, k-tile] @ x[k-tile]
    # (bf16 operands, f32 accumulation on the MXU).
    k0 = pl.multiple_of(k * tk, tk)
    x_k = x_buf[read_slot, pl.ds(k0, tk), :]          # bf16, no per-step cast
    acc_ref[...] += jnp.dot(a_ref[...], x_k, preferred_element_type=jnp.float32)

    @pl.when(k == nk - 1)
    def _():
        # GIN update for this row tile.
        r0 = pl.multiple_of(i * tm, tm)
        x_self = x_buf[read_slot, pl.ds(r0, tm), :].astype(jnp.float32)
        h = (1.0 + eps_ref[l]) * x_self + acc_ref[...]
        # GIN "MLP": Linear + ReLU.
        y = jnp.dot(h.astype(jnp.bfloat16), w_ref[...],
                    preferred_element_type=jnp.float32) + b_ref[...]
        y = jnp.maximum(y, 0.0)
        if normalize:
            # F.normalize(p=2, dim=-1): rsqrt goes to the EUP; padded lanes are 0.
            inv = jax.lax.rsqrt(jnp.sum(y * y, axis=-1, keepdims=True) + 1e-24)
            y = y * inv
        # gnn_non_linear (ReLU) is mathematically a no-op on the non-negative y.

        # New features for the next layer go into the other state slot (bf16).
        x_buf[1 - read_slot, pl.ds(r0, tm), :] = y.astype(x_buf.dtype)

        @pl.when(l == num_layers - 1)
        def _():
            # Manual DMA of the final-layer outputs for this row tile: avoids
            # per-layer spurious writebacks of stale pipelined output buffers.
            acc_ref[...] = y                      # reuse f32 scratch as DMA source
            pltpu.sync_copy(acc_ref, emb_hbm.at[pl.ds(r0, tm), :])

            logits = jnp.dot(y.astype(jnp.bfloat16), wout_ref[...],
                             preferred_element_type=jnp.float32) + bout_ref[...]
            logit_buf[...] = logits
            pltpu.sync_copy(logit_buf, logits_hbm.at[pl.ds(r0, tm), :])

            # Softmax over the real classes only (mask padded lanes); exact
            # normalization so row sums are 1.
            col = jax.lax.broadcasted_iota(jnp.int32, logits.shape, 1)
            masked = jnp.where(col < num_classes, logits, -1e30)
            m = jnp.max(masked, axis=-1, keepdims=True)
            e = jnp.exp(masked - m)
            denom = jnp.sum(e, axis=-1, keepdims=True)
            prob_buf[...] = e / denom
            pltpu.sync_copy(prob_buf, probs_hbm.at[pl.ds(r0, tm), :])


# ---------------------------------- wrapper -----------------------------------

def ginnet_nc_forward(x, edge_index, edge_weight, params, *,
                      emb_normlize=False, tile_m=512, tile_k=1024):
    n, f_in = x.shape
    gnn = params["gnn"]
    num_layers = len(gnn)
    latent = [w.shape[1] for (w, _, _) in gnn]
    out_w, out_b = params["out_w"], params["out_b"]
    num_classes = out_w.shape[1]

    if edge_weight is None:
        edge_weight = jnp.ones((edge_index.shape[1],), jnp.float32)

    # Lane-dense padded dims (multiples of 128); nodes padded to 128 only (no
    # lcm inflation) and tiles chosen as the largest 128-multiples dividing n_pad.
    f_pad = _round_up(max([f_in] + latent), 128)
    c_pad = _round_up(num_classes, 128)
    n_pad = _round_up(n, 128)
    tm = _pick_tile(tile_m, n_pad)
    tk = _pick_tile(tile_k, n_pad)

    # Dense adjacency A[dst, src] = edge_weight (aggr='add'), built directly in
    # bf16 (no transient f32 n_pad^2 array); accumulation stays f32 on the MXU.
    # TODO(synk): for large sparse graphs replace the dense A @ x with a
    # CSR/padded-neighbor gather kernel (scalar-prefetch row offsets) -> O(E*F);
    # A is also input-independent and could be cached across forward calls.
    src, dst = edge_index[0], edge_index[1]
    a = jnp.zeros((n_pad, n_pad), jnp.bfloat16).at[dst, src].add(
        edge_weight.astype(jnp.bfloat16))

    # Zero-padded inputs / parameters.  Zero padding keeps the padded feature
    # lanes at exactly 0 through every layer, so no masking is needed except in
    # the softmax over padded class lanes.  x0 is stored bf16 (matches the bf16
    # matmul operands and the bf16 feature-state scratch).
    x0 = jnp.zeros((n_pad, f_pad), jnp.bfloat16).at[:n, :f_in].set(
        x.astype(jnp.bfloat16))

    w_all = jnp.zeros((num_layers, f_pad, f_pad), jnp.float32)
    b_all = jnp.zeros((num_layers, 1, f_pad), jnp.float32)
    eps_all = jnp.zeros((num_layers,), jnp.float32)
    for li, (w, b, eps) in enumerate(gnn):
        w_all = w_all.at[li, :w.shape[0], :w.shape[1]].set(w)
        b_all = b_all.at[li, :, :b.shape[-1]].set(b.reshape(1, -1))
        eps_all = eps_all.at[li].set(eps.reshape(()))
    w_all = w_all.astype(jnp.bfloat16)

    w_out = jnp.zeros((f_pad, c_pad), jnp.float32).at[
        :out_w.shape[0], :num_classes].set(out_w).astype(jnp.bfloat16)
    b_out = jnp.zeros((1, c_pad), jnp.float32).at[:, :num_classes].set(
        out_b.reshape(1, -1))

    grid = (num_layers, n_pad // tm, n_pad // tk)

    # VMEM budget (no resident x0, bf16 feature state, no pipelined outputs).
    est = (2 * n_pad * f_pad * 2          # bf16 feature state (both slots)
           + 2 * tm * tk * 2              # adjacency tiles (bf16, double-buffered)
           + 2 * f_pad * f_pad * 2        # per-layer weight blocks (bf16, 2 bufs)
           + 2 * f_pad * 4                # per-layer bias blocks
           + 2 * f_pad * c_pad * 2        # output-head weight blocks
           + 2 * c_pad * 4                # output-head bias blocks
           + tm * f_pad * 4               # f32 aggregation accumulator
           + 2 * tm * c_pad * 4)          # logits / probs DMA staging
    vmem_limit = int(min(max(int(1.5 * est), 32 * 1024 * 1024), _vmem_cap_bytes()))

    kernel = functools.partial(_fused_gin_kernel,
                               num_classes=num_classes,
                               normalize=emb_normlize)

    emb_p, logits_p, probs_p = pl.pallas_call(
        kernel,
        grid=grid,
        in_specs=[
            pl.BlockSpec(memory_space=pltpu.MemorySpace.SMEM),              # eps (L,)
            pl.BlockSpec((tm, tk), lambda l, i, k: (i, k)),                 # A tiles
            pl.BlockSpec(memory_space=pl.ANY),                              # x0 (HBM)
            pl.BlockSpec((None, f_pad, f_pad), lambda l, i, k: (l, 0, 0)),  # W_l
            pl.BlockSpec((None, 1, f_pad), lambda l, i, k: (l, 0, 0)),      # b_l
            pl.BlockSpec((f_pad, c_pad), lambda l, i, k: (0, 0)),           # W_out
            pl.BlockSpec((1, c_pad), lambda l, i, k: (0, 0)),               # b_out
        ],
        out_specs=(
            pl.BlockSpec(memory_space=pl.ANY),                              # emb
            pl.BlockSpec(memory_space=pl.ANY),                              # logits
            pl.BlockSpec(memory_space=pl.ANY),                              # probs
        ),
        out_shape=(
            jax.ShapeDtypeStruct((n_pad, f_pad), jnp.float32),
            jax.ShapeDtypeStruct((n_pad, c_pad), jnp.float32),
            jax.ShapeDtypeStruct((n_pad, c_pad), jnp.float32),
        ),
        scratch_shapes=[
            pltpu.VMEM((2, n_pad, f_pad), jnp.bfloat16),  # feature state (2 slots)
            pltpu.VMEM((tm, f_pad), jnp.float32),         # aggregation accumulator
            pltpu.VMEM((tm, c_pad), jnp.float32),         # logits DMA staging
            pltpu.VMEM((tm, c_pad), jnp.float32),         # probs DMA staging
        ],
        # Layer axis and k-reduction are sequential; the row axis is NOT marked
        # "parallel" because the next layer (outer axis) reads every row tile
        # written by the previous one through the per-core x_buf scratch.
        # TODO(synk): v7x dual-TensorCore split of row tiles via pl.core_map +
        # VMEM_SHARED feature state + per-layer core_barrier.
        compiler_params=pltpu.CompilerParams(
            dimension_semantics=("arbitrary", "arbitrary", "arbitrary"),
            vmem_limit_bytes=vmem_limit),
    )(eps_all, a, x0, w_all, b_all, w_out, b_out)

    emb = emb_p[:n, :latent[-1]]
    logits = logits_p[:n, :num_classes]
    probs = probs_p[:n, :num_classes]
    return logits, probs, emb


# ---------------------------- pure-JAX reference ------------------------------

def reference_forward(x, edge_index, edge_weight, params, *, emb_normlize):
    n = x.shape[0]
    src, dst = edge_index[0], edge_index[1]
    a = jnp.zeros((n, n), jnp.float32).at[dst, src].add(edge_weight)
    h = x.astype(jnp.float32)
    for (w, b, eps) in params["gnn"]:
        agg = a @ h
        z = (1.0 + eps[0]) * h + agg
        y = jnp.maximum(z @ w + b, 0.0)
        if emb_normlize:
            y = y / jnp.maximum(jnp.sqrt(jnp.sum(y * y, -1, keepdims=True)), 1e-12)
        h = jnp.maximum(y, 0.0)
    emb = h
    logits = h @ params["out_w"] + params["out_b"]
    probs = jax.nn.softmax(logits, axis=-1)
    return logits, probs, emb


# ------------------------------ parameter init --------------------------------

def init_params(key, input_dim, latent_dim, output_dim):
    """Linear(in, out) stored as W:(in,out), b:(1,out); GIN eps init = 0.0."""
    params = {"gnn": []}
    dims = [input_dim] + list(latent_dim)
    for i in range(len(latent_dim)):
        key, kw, kb = jax.random.split(key, 3)
        fan_in = dims[i]
        w = jax.random.normal(kw, (dims[i], dims[i + 1]), jnp.float32) / jnp.sqrt(fan_in)
        b = jax.random.normal(kb, (1, dims[i + 1]), jnp.float32) * 0.01
        eps = jnp.zeros((1,), jnp.float32)          # train_eps=True, init 0
        params["gnn"].append((w, b, eps))
    key, kw, kb = jax.random.split(key, 3)
    params["out_w"] = jax.random.normal(kw, (latent_dim[-1], output_dim),
                                        jnp.float32) / jnp.sqrt(latent_dim[-1])
    params["out_b"] = jax.random.normal(kb, (1, output_dim), jnp.float32) * 0.01
    return params


# ----------------------------------- main --------------------------------------

if __name__ == "__main__":
    key = jax.random.PRNGKey(0)

    # small synthetic graph
    num_nodes, input_dim = 32, 16
    latent_dim = [32, 32]        # model_args.latent_dim
    output_dim = 8
    emb_normlize = False         # model_args.emb_normlize

    # bidirectional ring graph with per-edge weights (data.edge_weight)
    idx = jnp.arange(num_nodes, dtype=jnp.int32)
    src = jnp.concatenate([idx, (idx + 1) % num_nodes])
    dst = jnp.concatenate([(idx + 1) % num_nodes, idx])
    edge_index = jnp.stack([src, dst], axis=0)                   # (2, E)

    key, kx, kw = jax.random.split(key, 3)
    x = jax.random.normal(kx, (num_nodes, input_dim), jnp.float32)
    edge_weight = jax.random.uniform(kw, (edge_index.shape[1],), jnp.float32,
                                     minval=0.5, maxval=1.5)

    params = init_params(key, input_dim, latent_dim, output_dim)

    logits, probs, emb = ginnet_nc_forward(
        x, edge_index, edge_weight, params, emb_normlize=emb_normlize)
    jax.block_until_ready((logits, probs, emb))

    assert logits.shape == (num_nodes, output_dim)
    assert probs.shape == (num_nodes, output_dim)
    assert emb.shape == (num_nodes, latent_dim[-1])
    assert bool(jnp.all(jnp.isfinite(logits)))
    assert bool(jnp.allclose(jnp.sum(probs, axis=-1), 1.0, atol=5e-3))

    # loose numeric check vs. a pure-JAX f32 reference (kernel uses bf16 matmuls
    # and a bf16 inter-layer feature state)
    r_logits, r_probs, r_emb = reference_forward(
        x, edge_index, edge_weight, params, emb_normlize=emb_normlize)
    assert bool(jnp.allclose(logits, r_logits, atol=0.5, rtol=0.1))
    assert bool(jnp.allclose(emb, r_emb, atol=0.5, rtol=0.1))
    assert bool(jnp.allclose(probs, r_probs, atol=0.15))

    # also exercise the emb_normlize (L2-normalize) branch once
    logits_n, probs_n, emb_n = ginnet_nc_forward(
        x, edge_index, edge_weight, params, emb_normlize=True)
    jax.block_until_ready((logits_n, probs_n, emb_n))
    assert bool(jnp.allclose(jnp.sum(probs_n, axis=-1), 1.0, atol=5e-3))

    print("KERNEL_OK")
</pallas_src>

<mosaic_0001>
module attributes {stable_mosaic.version = 11 : i64} {
  func.func @_fused_gin_kernel(%arg0: i32, %arg1: i32, %arg2: i32, %arg3: memref<2xf32, #tpu.memory_space<smem>>, %arg4: memref<128x128xbf16, #tpu.memory_space<vmem>>, %arg5: memref<128x128xbf16, #tpu.memory_space<any>>, %arg6: memref<1x128x128xbf16, #tpu.memory_space<vmem>>, %arg7: memref<1x1x128xf32, #tpu.memory_space<vmem>>, %arg8: memref<128x128xbf16, #tpu.memory_space<vmem>>, %arg9: memref<1x128xf32, #tpu.memory_space<vmem>>, %arg10: memref<128x128xf32, #tpu.memory_space<any>>, %arg11: memref<128x128xf32, #tpu.memory_space<any>>, %arg12: memref<128x128xf32, #tpu.memory_space<any>>, %arg13: memref<2x128x128xbf16, #tpu.memory_space<vmem>>, %arg14: memref<128x128xf32, #tpu.memory_space<vmem>>, %arg15: memref<128x128xf32, #tpu.memory_space<vmem>>, %arg16: memref<128x128xf32, #tpu.memory_space<vmem>>) attributes {dimension_semantics = [#tpu.dimension_semantics<arbitrary>, #tpu.dimension_semantics<arbitrary>, #tpu.dimension_semantics<arbitrary>], iteration_bounds = array<i64: 2, 1, 1>, scalar_prefetch = 0 : i64, scratch_operands = 4 : i64, tpu.core_type = #tpu.core_type<tc>, window_params = [{transform_indices = @transform_0, window_bounds = array<i64: 2>}, {transform_indices = @transform_1, window_bounds = array<i64: 128, 128>}, {}, {transform_indices = @transform_3, window_bounds = array<i64: 1, 128, 128>}, {transform_indices = @transform_4, window_bounds = array<i64: 1, 1, 128>}, {pipeline_mode = #tpu.pipeline_mode<synchronous>, transform_indices = @transform_5, window_bounds = array<i64: 128, 128>}, {pipeline_mode = #tpu.pipeline_mode<synchronous>, transform_indices = @transform_6, window_bounds = array<i64: 1, 128>}, {}, {}, {}]} {
    %c0_i32 = arith.constant 0 : i32
    %0 = arith.cmpi eq, %arg0, %c0_i32 : i32
    %c0_i32_0 = arith.constant 0 : i32
    %1 = arith.cmpi eq, %arg1, %c0_i32_0 : i32
    %2 = arith.andi %0, %1 : i1
    %c0_i32_1 = arith.constant 0 : i32
    %3 = arith.cmpi eq, %arg2, %c0_i32_1 : i32
    %4 = arith.andi %2, %3 : i1
    %5 = arith.extui %4 : i1 to i32
    %c0_i32_2 = arith.constant 0 : i32
    %6 = arith.cmpi ne, %5, %c0_i32_2 : i32
    scf.if %6 {
      %c0_i32_17 = arith.constant 0 : i32
      "tpu.region"() ({
        %34 = tpu.sem_alloc : memref<!tpu.dma_semaphore, #tpu.memory_space<semaphore_mem>>
        %c0_i32_18 = arith.constant 0 : i32
        %c0_i32_19 = arith.constant 0 : i32
        %35 = tpu.memref_slice %arg13[%c0_i32_17, %c0_i32_18, %c0_i32_19] : memref<2x128x128xbf16, #tpu.memory_space<vmem>> -> memref<1x128x128xbf16, #tpu.memory_space<vmem>>
        %36 = tpu.memref_squeeze %35 : memref<1x128x128xbf16, #tpu.memory_space<vmem>> -> memref<128x128xbf16, #tpu.memory_space<vmem>>
        tpu.enqueue_dma source(%arg5 : memref<128x128xbf16, #tpu.memory_space<any>>) target(%36 : memref<128x128xbf16, #tpu.memory_space<vmem>>) target_semaphore(%34 : memref<!tpu.dma_semaphore, #tpu.memory_space<semaphore_mem>>)
        %c0_i32_20 = arith.constant 0 : i32
        %c0_i32_21 = arith.constant 0 : i32
        %37 = tpu.memref_slice %arg13[%c0_i32_17, %c0_i32_20, %c0_i32_21] : memref<2x128x128xbf16, #tpu.memory_space<vmem>> -> memref<1x128x128xbf16, #tpu.memory_space<vmem>>
        %38 = tpu.memref_squeeze %37 : memref<1x128x128xbf16, #tpu.memory_space<vmem>> -> memref<128x128xbf16, #tpu.memory_space<vmem>>
        tpu.wait_dma2 semaphore(%34 : memref<!tpu.dma_semaphore, #tpu.memory_space<semaphore_mem>>) src(%arg5 : memref<128x128xbf16, #tpu.memory_space<any>>) dst(%38 : memref<128x128xbf16, #tpu.memory_space<vmem>>)
        tpu.yield
      }) : () -> ()
    } else {
    }
    %c0_i32_3 = arith.constant 0 : i32
    %7 = arith.cmpi eq, %arg2, %c0_i32_3 : i32
    %8 = arith.extui %7 : i1 to i32
    %c0_i32_4 = arith.constant 0 : i32
    %9 = arith.cmpi ne, %8, %c0_i32_4 : i32
    scf.if %9 {
      %cst_17 = arith.constant 0.000000e+00 : f32
      %34 = vector.broadcast %cst_17 : f32 to vector<128x128xf32>
      %c0_18 = arith.constant 0 : index
      %c0_19 = arith.constant 0 : index
      %35 = vector.load %arg14[%c0_18, %c0_19] : memref<128x128xf32, #tpu.memory_space<vmem>>, vector<128x128xf32>
      tpu.vector_store %arg14[%c0_18, %c0_19], %34 {strides = array<i32>} : memref<128x128xf32, #tpu.memory_space<vmem>>, vector<128x128xf32>,
    } else {
    }
    %c2_i32 = arith.constant 2 : i32
    %c0_i32_5 = arith.constant 0 : i32
    %10 = arith.cmpi eq, %c2_i32, %c0_i32_5 : i32
    %c1_i32 = arith.constant 1 : i32
    %11 = arith.select %10, %c1_i32, %c2_i32 : i32
    %12 = arith.remsi %arg0, %11 : i32
    %c0_i32_6 = arith.constant 0 : i32
    %13 = arith.cmpi ne, %12, %c0_i32_6 : i32
    %c0_i32_7 = arith.constant 0 : i32
    %14 = arith.cmpi slt, %12, %c0_i32_7 : i32
    %c0_i32_8 = arith.constant 0 : i32
    %15 = arith.cmpi slt, %11, %c0_i32_8 : i32
    %16 = arith.xori %14, %15 : i1
    %17 = arith.andi %16, %13 : i1
    %18 = arith.addi %12, %11 : i32
    %19 = arith.select %17, %18, %12 : i32
    %c128_i32 = arith.constant 128 : i32
    %20 = arith.muli %arg2, %c128_i32 : i32
    %21 = tpu.assume_multiple %20, 128 : i32
    %22 = arith.index_cast %19 : i32 to index
    %23 = arith.index_cast %21 : i32 to index
    %c0 = arith.constant 0 : index
    %24 = vector.load %arg13[%22, %23, %c0] : memref<2x128x128xbf16, #tpu.memory_space<vmem>>, vector<1x128x128xbf16>
    %25 = vector.shape_cast %24 : vector<1x128x128xbf16> to vector<128x128xbf16>
    %c0_9 = arith.constant 0 : index
    %c0_10 = arith.constant 0 : index
    %26 = vector.load %arg14[%c0_9, %c0_10] : memref<128x128xf32, #tpu.memory_space<vmem>>, vector<128x128xf32>
    %c0_11 = arith.constant 0 : index
    %c0_12 = arith.constant 0 : index
    %27 = vector.load %arg4[%c0_11, %c0_12] : memref<128x128xbf16, #tpu.memory_space<vmem>>, vector<128x128xbf16>
    %cst = arith.constant dense<0.000000e+00> : vector<128x128xf32>
    %28 = tpu.matmul %27, %25, %cst {dimension_numbers = #tpu.dot_dimension_numbers<[1], [0], [0], [1], [0, 0, 1, 1], [], []>} : vector<128x128xbf16>, vector<128x128xbf16>, vector<128x128xf32> -> vector<128x128xf32>
    %29 = arith.addf %26, %28 : vector<128x128xf32>
    %c0_13 = arith.constant 0 : index
    %c0_14 = arith.constant 0 : index
    %30 = vector.load %arg14[%c0_13, %c0_14] : memref<128x128xf32, #tpu.memory_space<vmem>>, vector<128x128xf32>
    tpu.vector_store %arg14[%c0_13, %c0_14], %29 {strides = array<i32>} : memref<128x128xf32, #tpu.memory_space<vmem>>, vector<128x128xf32>,
    %c0_i32_15 = arith.constant 0 : i32
    %31 = arith.cmpi eq, %arg2, %c0_i32_15 : i32
    %32 = arith.extui %31 : i1 to i32
    %c0_i32_16 = arith.constant 0 : i32
    %33 = arith.cmpi ne, %32, %c0_i32_16 : i32
    scf.if %33 {
      %c128_i32_17 = arith.constant 128 : i32
      %34 = arith.muli %arg1, %c128_i32_17 : i32
      %35 = tpu.assume_multiple %34, 128 : i32
      %36 = arith.index_cast %19 : i32 to index
      %37 = arith.index_cast %35 : i32 to index
      %c0_18 = arith.constant 0 : index
      %38 = vector.load %arg13[%36, %37, %c0_18] : memref<2x128x128xbf16, #tpu.memory_space<vmem>>, vector<1x128x128xbf16>
      %39 = vector.shape_cast %38 : vector<1x128x128xbf16> to vector<128x128xbf16>
      %40 = arith.extf %39 : vector<128x128xbf16> to vector<128x128xf32>
      %41 = arith.index_cast %arg0 : i32 to index
      %42 = memref.load %arg3[%41] : memref<2xf32, #tpu.memory_space<smem>>
      %cst_19 = arith.constant 1.000000e+00 : f32
      %43 = arith.addf %cst_19, %42 : f32
      %44 = vector.broadcast %43 : f32 to vector<128x128xf32>
      %45 = arith.mulf %44, %40 : vector<128x128xf32>
      %c0_20 = arith.constant 0 : index
      %c0_21 = arith.constant 0 : index
      %46 = vector.load %arg14[%c0_20, %c0_21] : memref<128x128xf32, #tpu.memory_space<vmem>>, vector<128x128xf32>
      %47 = arith.addf %45, %46 : vector<128x128xf32>
      %48 = arith.truncf %47 : vector<128x128xf32> to vector<128x128xbf16>
      %c0_22 = arith.constant 0 : index
      %c0_23 = arith.constant 0 : index
      %c0_24 = arith.constant 0 : index
      %49 = vector.load %arg6[%c0_22, %c0_23, %c0_24] : memref<1x128x128xbf16, #tpu.memory_space<vmem>>, vector<1x128x128xbf16>
      %50 = vector.shape_cast %49 : vector<1x128x128xbf16> to vector<128x128xbf16>
      %cst_25 = arith.constant dense<0.000000e+00> : vector<128x128xf32>
      %51 = tpu.matmul %48, %50, %cst_25 {dimension_numbers = #tpu.dot_dimension_numbers<[1], [0], [0], [1], [0, 0, 1, 1], [], []>} : vector<128x128xbf16>, vector<128x128xbf16>, vector<128x128xf32> -> vector<128x128xf32>
      %c0_26 = arith.constant 0 : index
      %c0_27 = arith.constant 0 : index
      %c0_28 = arith.constant 0 : index
      %52 = vector.load %arg7[%c0_26, %c0_27, %c0_28] : memref<1x1x128xf32, #tpu.memory_space<vmem>>, vector<1x1x128xf32>
      %53 = vector.shape_cast %52 : vector<1x1x128xf32> to vector<1x128xf32>
      %54 = vector.broadcast %53 : vector<1x128xf32> to vector<128x128xf32>
      %55 = arith.addf %51, %54 : vector<128x128xf32>
      %cst_29 = arith.constant 0.000000e+00 : f32
      %56 = vector.broadcast %cst_29 : f32 to vector<128x128xf32>
      %57 = arith.maximumf %55, %56 : vector<128x128xf32>
      %58 = arith.truncf %57 : vector<128x128xf32> to vector<128x128xbf16>
      %c1_i32_30 = arith.constant 1 : i32
      %59 = arith.subi %c1_i32_30, %19 : i32
      %60 = arith.index_cast %59 : i32 to index
      %61 = arith.index_cast %35 : i32 to index
      %c0_31 = arith.constant 0 : index
      %62 = vector.load %arg13[%60, %61, %c0_31] : memref<2x128x128xbf16, #tpu.memory_space<vmem>>, vector<1x128x128xbf16>
      %63 = vector.shape_cast %62 : vector<1x128x128xbf16> to vector<128x128xbf16>
      %64 = vector.shape_cast %58 : vector<128x128xbf16> to vector<1x128x128xbf16>
      tpu.vector_store %arg13[%60, %61, %c0_31], %64 {strides = array<i32>} : memref<2x128x128xbf16, #tpu.memory_space<vmem>>, vector<1x128x128xbf16>,
      %c1_i32_32 = arith.constant 1 : i32
      %65 = arith.cmpi eq, %arg0, %c1_i32_32 : i32
      %66 = arith.extui %65 : i1 to i32
      %c0_i32_33 = arith.constant 0 : i32
      %67 = arith.cmpi ne, %66, %c0_i32_33 : i32
      scf.if %67 {
        %c0_34 = arith.constant 0 : index
        %c0_35 = arith.constant 0 : index
        %68 = vector.load %arg14[%c0_34, %c0_35] : memref<128x128xf32, #tpu.memory_space<vmem>>, vector<128x128xf32>
        tpu.vector_store %arg14[%c0_34, %c0_35], %57 {strides = array<i32>} : memref<128x128xf32, #tpu.memory_space<vmem>>, vector<128x128xf32>,
        "tpu.region"() ({
          %91 = tpu.sem_alloc : memref<!tpu.dma_semaphore, #tpu.memory_space<semaphore_mem>>
          %c0_i32_48 = arith.constant 0 : i32
          %92 = tpu.memref_slice %arg10[%35, %c0_i32_48] : memref<128x128xf32, #tpu.memory_space<any>> -> memref<128x128xf32, #tpu.memory_space<any>>
          tpu.enqueue_dma source(%arg14 : memref<128x128xf32, #tpu.memory_space<vmem>>) target(%92 : memref<128x128xf32, #tpu.memory_space<any>>) target_semaphore(%91 : memref<!tpu.dma_semaphore, #tpu.memory_space<semaphore_mem>>)
          %c0_i32_49 = arith.constant 0 : i32
          %93 = tpu.memref_slice %arg10[%35, %c0_i32_49] : memref<128x128xf32, #tpu.memory_space<any>> -> memref<128x128xf32, #tpu.memory_space<any>>
          tpu.wait_dma2 semaphore(%91 : memref<!tpu.dma_semaphore, #tpu.memory_space<semaphore_mem>>) src(%arg14 : memref<128x128xf32, #tpu.memory_space<vmem>>) dst(%93 : memref<128x128xf32, #tpu.memory_space<any>>)
          tpu.yield
        }) : () -> ()
        %69 = arith.truncf %57 : vector<128x128xf32> to vector<128x128xbf16>
        %c0_36 = arith.constant 0 : index
        %c0_37 = arith.constant 0 : index
        %70 = vector.load %arg8[%c0_36, %c0_37] : memref<128x128xbf16, #tpu.memory_space<vmem>>, vector<128x128xbf16>
        %cst_38 = arith.constant dense<0.000000e+00> : vector<128x128xf32>
        %71 = tpu.matmul %69, %70, %cst_38 {dimension_numbers = #tpu.dot_dimension_numbers<[1], [0], [0], [1], [0, 0, 1, 1], [], []>} : vector<128x128xbf16>, vector<128x128xbf16>, vector<128x128xf32> -> vector<128x128xf32>
        %c0_39 = arith.constant 0 : index
        %c0_40 = arith.constant 0 : index
        %72 = vector.load %arg9[%c0_39, %c0_40] : memref<1x128xf32, #tpu.memory_space<vmem>>, vector<1x128xf32>
        %73 = vector.broadcast %72 : vector<1x128xf32> to vector<128x128xf32>
        %74 = arith.addf %71, %73 : vector<128x128xf32>
        %c0_41 = arith.constant 0 : index
        %c0_42 = arith.constant 0 : index
        %75 = vector.load %arg15[%c0_41, %c0_42] : memref<128x128xf32, #tpu.memory_space<vmem>>, vector<128x128xf32>
        tpu.vector_store %arg15[%c0_41, %c0_42], %74 {strides = array<i32>} : memref<128x128xf32, #tpu.memory_space<vmem>>, vector<128x128xf32>,
        "tpu.region"() ({
          %91 = tpu.sem_alloc : memref<!tpu.dma_semaphore, #tpu.memory_space<semaphore_mem>>
          %c0_i32_48 = arith.constant 0 : i32
          %92 = tpu.memref_slice %arg11[%35, %c0_i32_48] : memref<128x128xf32, #tpu.memory_space<any>> -> memref<128x128xf32, #tpu.memory_space<any>>
          tpu.enqueue_dma source(%arg15 : memref<128x128xf32, #tpu.memory_space<vmem>>) target(%92 : memref<128x128xf32, #tpu.memory_space<any>>) target_semaphore(%91 : memref<!tpu.dma_semaphore, #tpu.memory_space<semaphore_mem>>)
          %c0_i32_49 = arith.constant 0 : i32
          %93 = tpu.memref_slice %arg11[%35, %c0_i32_49] : memref<128x128xf32, #tpu.memory_space<any>> -> memref<128x128xf32, #tpu.memory_space<any>>
          tpu.wait_dma2 semaphore(%91 : memref<!tpu.dma_semaphore, #tpu.memory_space<semaphore_mem>>) src(%arg15 : memref<128x128xf32, #tpu.memory_space<vmem>>) dst(%93 : memref<128x128xf32, #tpu.memory_space<any>>)
          tpu.yield
        }) : () -> ()
        %76 = tpu.iota {dimensions = array<i32: 1>} : vector<128x128xi32>
        %c8_i32 = arith.constant 8 : i32
        %77 = vector.broadcast %c8_i32 : i32 to vector<128x128xi32>
        %78 = arith.cmpi slt, %76, %77 : vector<128x128xi32>
        %cst_43 = arith.constant -1.000000e+30 : f32
        %79 = vector.broadcast %cst_43 : f32 to vector<128x128xf32>
        %80 = arith.select %78, %74, %79 : vector<128x128xi1>, vector<128x128xf32>
        %cst_44 = arith.constant dense<0xFF800000> : vector<128xf32>
        %81 = vector.multi_reduction <maximumf>, %80, %cst_44 [1] : vector<128x128xf32> to vector<128xf32>
        %82 = vector.shape_cast %81 : vector<128xf32> to vector<128x1xf32>
        %83 = vector.broadcast %82 : vector<128x1xf32> to vector<128x128xf32>
        %84 = arith.subf %80, %83 : vector<128x128xf32>
        %85 = math.exp %84 : vector<128x128xf32>
        %cst_45 = arith.constant dense<0.000000e+00> : vector<128xf32>
        %86 = vector.multi_reduction <add>, %85, %cst_45 [1] : vector<128x128xf32> to vector<128xf32>
        %87 = vector.shape_cast %86 : vector<128xf32> to vector<128x1xf32>
        %88 = vector.broadcast %87 : vector<128x1xf32> to vector<128x128xf32>
        %89 = arith.divf %85, %88 : vector<128x128xf32>
        %c0_46 = arith.constant 0 : index
        %c0_47 = arith.constant 0 : index
        %90 = vector.load %arg16[%c0_46, %c0_47] : memref<128x128xf32, #tpu.memory_space<vmem>>, vector<128x128xf32>
        tpu.vector_store %arg16[%c0_46, %c0_47], %89 {strides = array<i32>} : memref<128x128xf32, #tpu.memory_space<vmem>>, vector<128x128xf32>,
        "tpu.region"() ({
          %91 = tpu.sem_alloc : memref<!tpu.dma_semaphore, #tpu.memory_space<semaphore_mem>>
          %c0_i32_48 = arith.constant 0 : i32
          %92 = tpu.memref_slice %arg12[%35, %c0_i32_48] : memref<128x128xf32, #tpu.memory_space<any>> -> memref<128x128xf32, #tpu.memory_space<any>>
          tpu.enqueue_dma source(%arg16 : memref<128x128xf32, #tpu.memory_space<vmem>>) target(%92 : memref<128x128xf32, #tpu.memory_space<any>>) target_semaphore(%91 : memref<!tpu.dma_semaphore, #tpu.memory_space<semaphore_mem>>)
          %c0_i32_49 = arith.constant 0 : i32
          %93 = tpu.memref_slice %arg12[%35, %c0_i32_49] : memref<128x128xf32, #tpu.memory_space<any>> -> memref<128x128xf32, #tpu.memory_space<any>>
          tpu.wait_dma2 semaphore(%91 : memref<!tpu.dma_semaphore, #tpu.memory_space<semaphore_mem>>) src(%arg16 : memref<128x128xf32, #tpu.memory_space<vmem>>) dst(%93 : memref<128x128xf32, #tpu.memory_space<any>>)
          tpu.yield
        }) : () -> ()
      } else {
      }
    } else {
    }
    return
  }
  func.func @transform_0(%arg0: i32, %arg1: i32, %arg2: i32) -> i32 {
    %c0_i32 = arith.constant 0 : i32
    %c0_i32_0 = arith.constant 0 : i32
    return %c0_i32 : i32
  }
  func.func @transform_1(%arg0: i32, %arg1: i32, %arg2: i32) -> (i32, i32) {
    %c0_i32 = arith.constant 0 : i32
    return %arg1, %arg2 : i32, i32
  }
  func.func @transform_3(%arg0: i32, %arg1: i32, %arg2: i32) -> (i32, i32, i32) {
    %c0_i32 = arith.constant 0 : i32
    %c0_i32_0 = arith.constant 0 : i32
    %c0_i32_1 = arith.constant 0 : i32
    return %arg0, %c0_i32, %c0_i32_0 : i32, i32, i32
  }
  func.func @transform_4(%arg0: i32, %arg1: i32, %arg2: i32) -> (i32, i32, i32) {
    %c0_i32 = arith.constant 0 : i32
    %c0_i32_0 = arith.constant 0 : i32
    %c0_i32_1 = arith.constant 0 : i32
    return %arg0, %c0_i32, %c0_i32_0 : i32, i32, i32
  }
  func.func @transform_5(%arg0: i32, %arg1: i32, %arg2: i32) -> (i32, i32) {
    %c0_i32 = arith.constant 0 : i32
    %c0_i32_0 = arith.constant 0 : i32
    %c0_i32_1 = arith.constant 0 : i32
    return %c0_i32, %c0_i32_0 : i32, i32
  }
  func.func @transform_6(%arg0: i32, %arg1: i32, %arg2: i32) -> (i32, i32) {
    %c0_i32 = arith.constant 0 : i32
    %c0_i32_0 = arith.constant 0 : i32
    %c0_i32_1 = arith.constant 0 : i32
    return %c0_i32, %c0_i32_0 : i32, i32
  }
}

</mosaic_0001>

<llo_original>
// kernel: tpu_custom_call.1
$region0: #{tpu_custom_call.1}
  #allocation0 [shape = 'u32[]', space=smem, size = 0x4, offset = 0x4, fixed_abs, tag = 'smem constant byte address 0x4 - core index']
  #allocation1 [shape = 'u32[72,128]{1,0:T(1,128)}', space=vmem, size = 0x9000, scoped, tag = 'internal scratch']
  #allocation2 [shape = 'bf16[2,128,128]{2,1,0:T(8,128)(2,1)}', space=vmem, size = 0x10000, scoped, tag = 'scratch operand']
  #allocation3 [shape = 'f32[128,128]{1,0:T(8,128)}', space=vmem, size = 0x10000, scoped, tag = 'scratch operand']
  #allocation4 [shape = 'f32[128,128]{1,0:T(8,128)}', space=vmem, size = 0x10000, scoped, tag = 'scratch operand']
  #allocation5 [shape = 'f32[128,128]{1,0:T(8,128)}', space=vmem, size = 0x10000, scoped, tag = 'scratch operand']
  #allocation14 [shape = 's32[]', space=sflag, size = 0x4, offset = 0, fixed_abs, tag = 'sflag constant byte address 0x0 - dummy sync flag']
  #allocation15 [shape = 's32[]', space=sflag, size = 0x4, offset = 0, fixed_abs, tag = 'sflag constant byte address 0x0 - dummy sync flag']
  #allocation16 [shape = 'u32[]', space=smem, size = 0x4, offset = 0x44, fixed_abs, tag = 'smem constant byte address 0x44 - assertion arg 0']
  #allocation17 [shape = 'u32[]', space=smem, size = 0x4, offset = 0x48, fixed_abs, tag = 'smem constant byte address 0x48 - assertion arg 1']
  #allocation19 [shape = 's32[]', space=sflag, size = 0x4, offset = 0, fixed_abs, tag = 'sflag constant byte address 0x0 - dummy sync flag']
  #allocation20 [shape = 's32[]', space=sflag, size = 0x4, offset = 0, fixed_abs, tag = 'sflag constant byte address 0x0 - dummy sync flag']
  #allocation22 [shape = 's32[]', space=sflag, size = 0x4, offset = 0, fixed_abs, tag = 'sflag constant byte address 0x0 - dummy sync flag']
  #allocation23 [shape = 's32[]', space=sflag, size = 0x4, offset = 0, fixed_abs, tag = 'sflag constant byte address 0x0 - dummy sync flag']
  #allocation25 [shape = 's32[]', space=sflag, size = 0x4, offset = 0, fixed_abs, tag = 'sflag constant byte address 0x0 - dummy sync flag']
  #allocation26 [shape = 's32[]', space=sflag, size = 0x4, offset = 0, fixed_abs, tag = 'sflag constant byte address 0x0 - dummy sync flag']
  %s0 = inlined_call_operand.hbm [shape: f32[2], index: 0, kind: input, shape index: {}]
  %s1 = inlined_call_operand.hbm [shape: bf16[128,128], index: 1, kind: input, shape index: {}]
  %s2 = inlined_call_operand.hbm [shape: bf16[128,128], index: 2, kind: input, shape index: {}]
  %s3 = inlined_call_operand.hbm [shape: bf16[2,128,128], index: 3, kind: input, shape index: {}]
  %s4 = inlined_call_operand.vmem [shape: f32[2,1,128], index: 4, kind: input, shape index: {}]
  %s5 = inlined_call_operand.hbm [shape: bf16[128,128], index: 5, kind: input, shape index: {}]
  %s6 = inlined_call_operand.vmem [shape: f32[1,128], index: 6, kind: input, shape index: {}]
  %s7 = inlined_call_operand.hbm [shape: f32[128,128], index: 7, kind: output, shape index: {0}]
  %s8 = inlined_call_operand.hbm [shape: f32[128,128], index: 8, kind: output, shape index: {1}]
  %s9 = inlined_call_operand.hbm [shape: f32[128,128], index: 9, kind: output, shape index: {2}]
  %10 = xla_tuple %s7, %s8, %s9
  %s11 = sld [smem:[#allocation0]]
  $region97: #{tpu_custom_call.1} parent=0
    _
  %s13 = ssub.s32 1, %s11
  %s14 = scalar_select 0, %s13, %s11
  $region1: #{tpu_custom_call.1} parent=0
    #allocation6 [shape = 'u8[512]{0}', space=smem, size = 0x200, scoped, tag = 'input window, operand 0, single buffered']
    #allocation7 [shape = 's32[2]{0}', space=sflag, size = 0x8, scoped, tag = 'scoped memory for tpu_custom_call.1']
    #allocation8 [shape = 's32[2]{0}', space=sflag, size = 0x8, scoped, tag = 'scoped memory for tpu_custom_call.1']
    #allocation9 [shape = 'u8[32768]{0}', space=vmem, size = 0x8000, scoped, tag = 'input window, operand 1, single buffered']
    #allocation10 [shape = 'u8[65536]{0}', space=vmem, size = 0x10000, scoped, tag = 'input window, operand 3']
    #allocation11 [shape = 's32[2]{0}', space=sflag, size = 0x8, scoped, tag = 'scoped memory for tpu_custom_call.1']
    #allocation12 [shape = 'u8[32768]{0}', space=vmem, size = 0x8000, scoped, tag = 'input window, operand 5, single buffered']
    %15 = vsyncpa [#allocation8], 0
    %16 = vsyncpa [#allocation7], 0
    %17 = vsyncpa [#allocation11], 0
    %s18 = scalar_lea.sflag [#allocation11], 1
    %19 = vsyncpa %s18, 0
    loop: start=0, step=1, limit=3
    $region2: #{tpu_custom_call.1} parent=1 // loop_pre_header
      _
    $region3: #{tpu_custom_call.1} parent=1 // loop_header
      %s21 = sphi 0, %s25
      %p22 = scmp.ge.s32.totalorder %s21, 3
      %s27 = sphi 0, %s43
      %s28 = sphi 0, %s39
      %s29 = sphi 0, %s35
      %s30 = sphi 0, %s27
      %s31 = sphi 0, %s28
      %s32 = sphi 0, %s29
      %s44 = sphi 0, %s44
      %s46 = sphi 0, %s44
      %s54 = sphi 0, %s46
      %s62 = sphi 0, %s64
      %s65 = sphi 0, %s62
      %s75 = sphi 0, %s65
      %s81 = sphi 0, %s83
      %s84 = sphi 0, %s81
      %s94 = sphi 0, %s84
      %s100 = sphi 0, %s102
      %s103 = sphi 0, %s100
      %s113 = sphi 0, %s103
      %s117 = sphi 0, %s117
      %s119 = sphi 0, %s117
      %s127 = sphi 0, %s119
      %s131 = sphi 0, %s131
      %s133 = sphi 0, %s131
      %s141 = sphi 0, %s133
    $region4: #{tpu_custom_call.1} parent=1 // loop_header_branch
      %24 = sbr.rel (%p22) target = $region8
    $region5: #{tpu_custom_call.1} parent=1 // loop_body
      %s26 = ssub.s32 %s21, 1
      %s33 = sadd.s32 1, %s29
      %p34 = scmp.ge.s32.totalorder %s33, 1
      %s35 = scalar_select %p34, 0, %s33
      %s36 = sadd.s32 1, %s28
      %s37 = scalar_select %p34, %s36, %s28
      %p38 = scmp.ge.s32.totalorder %s37, 1
      %s39 = scalar_select %p38, 0, %s37
      %s40 = sadd.s32 1, %s27
      %s41 = scalar_select %p38, %s40, %s27
      %p42 = scmp.ge.s32.totalorder %s41, 2
      %s43 = scalar_select %p42, 0, %s41
      %s45 = sadd.s32 %s44, 1
      %p47 = scmp.eq.s32.totalorder %s21, 1
      %p48 = scmp.ne.s32.totalorder %s44, %s46
      %p49 = scmp.eq.s32.totalorder %s21, 0
      %p50 = por %p48, %p49
      %p51 = scmp.ne.s32.totalorder %s44, %s46
      %p52 = scmp.eq.s32.totalorder %s26, 1
      %p53 = por %p51, %p52
      %p55 = scmp.ne.s32.totalorder %s46, %s54
      %p56 = scmp.eq.s32.totalorder %s26, 0
      %p57 = por %p55, %p56
      %s58 = ssub.s32 %s28, %s39
      %s59 = ssub.s32 %s29, %s35
      %s60 = sor.u32 %s58, %s59
      %p61 = scmp.eq.s32.totalorder %s60, 0
      %s63 = sadd.s32 %s62, 1
      %s64 = scalar_select %p61, %s62, %s63
      %p66 = pneg %p61
      %p67 = scmp.eq.s32.totalorder %s21, 1
      %p68 = por %p66, %p67
      %p69 = scmp.ne.s32.totalorder %s62, %s65
      %p70 = scmp.eq.s32.totalorder %s21, 0
      %p71 = por %p69, %p70
      %p72 = scmp.ne.s32.totalorder %s62, %s65
      %p73 = scmp.eq.s32.totalorder %s26, 1
      %p74 = por %p72, %p73
      %p76 = scmp.ne.s32.totalorder %s65, %s75
      %p77 = scmp.eq.s32.totalorder %s26, 0
      %p78 = por %p76, %p77
      %s79 = ssub.s32 %s27, %s43
      %p80 = scmp.eq.s32.totalorder %s79, 0
      %s82 = sadd.s32 %s81, 1
      %s83 = scalar_select %p80, %s81, %s82
      %p85 = pneg %p80
      %p86 = scmp.eq.s32.totalorder %s21, 1
      %p87 = por %p85, %p86
      %p88 = scmp.ne.s32.totalorder %s81, %s84
      %p89 = scmp.eq.s32.totalorder %s21, 0
      %p90 = por %p88, %p89
      %p91 = scmp.ne.s32.totalorder %s81, %s84
      %p92 = scmp.eq.s32.totalorder %s26, 1
      %p93 = por %p91, %p92
      %p95 = scmp.ne.s32.totalorder %s84, %s94
      %p96 = scmp.eq.s32.totalorder %s26, 0
      %p97 = por %p95, %p96
      %s98 = ssub.s32 %s27, %s43
      %p99 = scmp.eq.s32.totalorder %s98, 0
      %s101 = sadd.s32 %s100, 1
      %s102 = scalar_select %p99, %s100, %s101
      %p104 = pneg %p99
      %p105 = scmp.eq.s32.totalorder %s21, 1
      %p106 = por %p104, %p105
      %p107 = scmp.ne.s32.totalorder %s100, %s103
      %p108 = scmp.eq.s32.totalorder %s21, 0
      %p109 = por %p107, %p108
      %p110 = scmp.ne.s32.totalorder %s100, %s103
      %p111 = scmp.eq.s32.totalorder %s26, 1
      %p112 = por %p110, %p111
      %p114 = scmp.ne.s32.totalorder %s103, %s113
      %p115 = scmp.eq.s32.totalorder %s26, 0
      %p116 = por %p114, %p115
      %s118 = sadd.s32 %s117, 1
      %p120 = scmp.eq.s32.totalorder %s21, 1
      %p121 = scmp.ne.s32.totalorder %s117, %s119
      %p122 = scmp.eq.s32.totalorder %s21, 0
      %p123 = por %p121, %p122
      %p124 = scmp.ne.s32.totalorder %s117, %s119
      %p125 = scmp.eq.s32.totalorder %s26, 1
      %p126 = por %p124, %p125
      %p128 = scmp.ne.s32.totalorder %s119, %s127
      %p129 = scmp.eq.s32.totalorder %s26, 0
      %p130 = por %p128, %p129
      %s132 = sadd.s32 %s131, 1
      %p134 = scmp.eq.s32.totalorder %s21, 1
      %p135 = scmp.ne.s32.totalorder %s131, %s133
      %p136 = scmp.eq.s32.totalorder %s21, 0
      %p137 = por %p135, %p136
      %p138 = scmp.ne.s32.totalorder %s131, %s133
      %p139 = scmp.eq.s32.totalorder %s26, 1
      %p140 = por %p138, %p139
      %p142 = scmp.ne.s32.totalorder %s133, %s141
      %p143 = scmp.eq.s32.totalorder %s26, 0
      %p144 = por %p142, %p143
      %p145 = scmp.le.s32.totalorder 1, %s21
      // Predicated region
      $region9: #{tpu_custom_call.1} parent=5 // pred_check
        %p146 = pneg %p145
      $region10: #{tpu_custom_call.1} parent=5 // pred_check_branch
        %148 = sbr.rel (%p146) target = $region12
      $region11: #{tpu_custom_call.1} parent=5 // pred_region
        %s149 = ssub.s32 %s21, 1
        // Predicated region
        $region13: #{tpu_custom_call.1} parent=11 // pred_check
          %p150 = pneg %p57
        $region14: #{tpu_custom_call.1} parent=11 // pred_check_branch
          %152 = sbr.rel (%p150) target = $region16
        $region15: #{tpu_custom_call.1} parent=11 // pred_region
          %154 = vsyncadd [#allocation8], 0
          %s156 = sshll.u32 %s0, 4
          %s157 = int_to_ptr.hbm [resolvable:$true] %s156
          %159 = dma.hbm_to_smem %s157, 16, [#allocation6], [#allocation8]
        $region16: #{tpu_custom_call.1} parent=11 // pred_fallthru
          _
        // Predicated region
        $region17: #{tpu_custom_call.1} parent=11 // pred_check
          %p160 = pneg %p78
        $region18: #{tpu_custom_call.1} parent=11 // pred_check_branch
          %162 = sbr.rel (%p160) target = $region20
        $region19: #{tpu_custom_call.1} parent=11 // pred_region
          %s163 = smul.u32 16, %s31
          %165 = vsyncadd [#allocation7], 0
          %s166 = sadd.s32 %s32, %s163
          %s167 = smul.addr %s166, 4
          %s168 = scalar_lea.hbm %s1, %s167
          %s169 = sshll.u32 %s168, 4
          %s170 = int_to_ptr.hbm [resolvable:$true] %s169
          %s171 = sshll.u32 [#allocation9], 4
          %s172 = int_to_ptr.vmem [resolvable:$true] %s171
          %177 = dma.hbm_to_vmem [thread:$0]  %s170, 1024, %s172, [#allocation7], 64, 64, 4
        $region20: #{tpu_custom_call.1} parent=11 // pred_fallthru
          _
        // Predicated region
        $region21: #{tpu_custom_call.1} parent=11 // pred_check
          %p178 = pneg %p130
        $region22: #{tpu_custom_call.1} parent=11 // pred_check_branch
          %180 = sbr.rel (%p178) target = $region24
        $region23: #{tpu_custom_call.1} parent=11 // pred_region
          %182 = vsyncadd [#allocation11], 0
          %s183 = sshll.u32 %s5, 4
          %s184 = int_to_ptr.hbm [resolvable:$true] %s183
          %s185 = sshll.u32 [#allocation12], 4
          %s186 = int_to_ptr.vmem [resolvable:$true] %s185
          %191 = dma.hbm_to_vmem [thread:$0]  %s184, 1024, %s186, [#allocation11], 64, 64, 4
        $region24: #{tpu_custom_call.1} parent=11 // pred_fallthru
          _
        // Predicated region
        $region25: #{tpu_custom_call.1} parent=11 // pred_check
          %p192 = pneg %p144
        $region26: #{tpu_custom_call.1} parent=11 // pred_check_branch
          %194 = sbr.rel (%p192) target = $region28
        $region27: #{tpu_custom_call.1} parent=11 // pred_region
          _
        $region28: #{tpu_custom_call.1} parent=11 // pred_fallthru
          _
      $region12: #{tpu_custom_call.1} parent=5 // pred_fallthru
        _
      %p195 = scmp.lt.s32.totalorder %s21, 2
      // Predicated region
      $region29: #{tpu_custom_call.1} parent=5 // pred_check
        %p196 = pneg %p195
      $region30: #{tpu_custom_call.1} parent=5 // pred_check_branch
        %198 = sbr.rel (%p196) target = $region32
      $region31: #{tpu_custom_call.1} parent=5 // pred_region
        // Predicated region
        $region33: #{tpu_custom_call.1} parent=31 // pred_check
          %p199 = pneg %p90
        $region34: #{tpu_custom_call.1} parent=31 // pred_check_branch
          %201 = sbr.rel (%p199) target = $region36
        $region35: #{tpu_custom_call.1} parent=31 // pred_region
          %s202 = sand.u32 %s21, 1
          %s203 = scalar_lea.sflag [#allocation11], %s202
          %s204 = sand.u32 %s81, 1
          %s205 = smul.addr %s204, 64
          %s206 = scalar_lea.vmem [#allocation10], %s205
          %208 = vsyncadd %s203, 0
          %s209 = smul.addr %s27, 16
          %s210 = smul.addr %s209, 4
          %s211 = scalar_lea.hbm %s3, %s210
          %s212 = sshll.u32 %s211, 4
          %s213 = int_to_ptr.hbm [resolvable:$true] %s212
          %s214 = sshll.u32 %s206, 4
          %s215 = int_to_ptr.vmem [resolvable:$true] %s214
          %220 = dma.hbm_to_vmem [thread:$0]  %s213, 1024, %s215, %s203, 64, 64, 4
        $region36: #{tpu_custom_call.1} parent=31 // pred_fallthru
          _
        // Predicated region
        $region37: #{tpu_custom_call.1} parent=31 // pred_check
          %p221 = pneg %p109
        $region38: #{tpu_custom_call.1} parent=31 // pred_check_branch
          %223 = sbr.rel (%p221) target = $region40
        $region39: #{tpu_custom_call.1} parent=31 // pred_region
          %p224 = scmp.lt.s32.totalorder %s27, 1
          %s225 = scalar_select %p224, %s27, 1
          %s226 = scalar_lea.vmem %s4, %s225
        $region40: #{tpu_custom_call.1} parent=31 // pred_fallthru
          _
      $region32: #{tpu_custom_call.1} parent=5 // pred_fallthru
        _
      %p227 = scmp.le.s32.totalorder 1, %s21
      // Predicated region
      $region41: #{tpu_custom_call.1} parent=5 // pred_check
        %p228 = pneg %p227
      $region42: #{tpu_custom_call.1} parent=5 // pred_check_branch
        %230 = sbr.rel (%p228) target = $region44
      $region43: #{tpu_custom_call.1} parent=5 // pred_region
        %s231 = ssub.s32 %s21, 1
        // Predicated region
        $region45: #{tpu_custom_call.1} parent=43 // pred_check
          %p232 = pneg %p57
        $region46: #{tpu_custom_call.1} parent=43 // pred_check_branch
          %234 = sbr.rel (%p232) target = $region48
        $region47: #{tpu_custom_call.1} parent=43 // pred_region
          %236 = dma.done [#allocation8], 16
        $region48: #{tpu_custom_call.1} parent=43 // pred_fallthru
          _
        // Predicated region
        $region49: #{tpu_custom_call.1} parent=43 // pred_check
          %p237 = pneg %p78
        $region50: #{tpu_custom_call.1} parent=43 // pred_check_branch
          %239 = sbr.rel (%p237) target = $region52
        $region51: #{tpu_custom_call.1} parent=43 // pred_region
          %241 = dma.done [#allocation7], 1024
        $region52: #{tpu_custom_call.1} parent=43 // pred_fallthru
          _
        %s242 = sand.u32 %s26, 1
        %s243 = scalar_lea.sflag [#allocation11], %s242
        %s244 = sand.u32 %s84, 1
        %s245 = smul.addr %s244, 64
        %s246 = scalar_lea.vmem [#allocation10], %s245
        // Predicated region
        $region53: #{tpu_custom_call.1} parent=43 // pred_check
          %p247 = pneg %p97
        $region54: #{tpu_custom_call.1} parent=43 // pred_check_branch
          %249 = sbr.rel (%p247) target = $region56
        $region55: #{tpu_custom_call.1} parent=43 // pred_region
          %251 = dma.done %s243, 1024
        $region56: #{tpu_custom_call.1} parent=43 // pred_fallthru
          _
        // Predicated region
        $region57: #{tpu_custom_call.1} parent=43 // pred_check
          %p252 = pneg %p130
        $region58: #{tpu_custom_call.1} parent=43 // pred_check_branch
          %254 = sbr.rel (%p252) target = $region60
        $region59: #{tpu_custom_call.1} parent=43 // pred_region
          %256 = dma.done [#allocation11], 1024
        $region60: #{tpu_custom_call.1} parent=43 // pred_fallthru
          _
        %257 = sfence
        %p258 = pneg %p57
        %p259 = pneg %p53
        %p260 = pneg %p78
        %p261 = pneg %p74
        %s262 = sand.u32 %s26, 1
        %s263 = scalar_lea.sflag [#allocation11], %s262
        %s264 = sand.u32 %s84, 1
        %s265 = smul.addr %s264, 64
        %s266 = scalar_lea.vmem [#allocation10], %s265
        %p267 = pneg %p97
        %p268 = pneg %p93
        %p269 = scmp.lt.s32.totalorder %s30, 1
        %s270 = scalar_select %p269, %s30, 1
        %s271 = scalar_lea.vmem %s4, %s270
        %p272 = pneg %p116
        %p273 = pneg %p112
        %p274 = pneg %p130
        %p275 = pneg %p126
        %p276 = pneg %p144
        %p277 = pneg %p140
        %s278 = smul.u32 16, %s31
        %p279 = scmp.lt.s32.totalorder %s30, 1
        %s280 = scalar_select %p279, %s30, 1
        %s281 = scalar_lea.vmem %s4, %s280
        %p282 = scmp.eq.s32.totalorder %s30, 0
        %p283 = scmp.eq.s32.totalorder %s31, 0
        %p284 = pnand %p282, %p283
        %p285 = pneg %p284
        %p286 = scmp.eq.s32.totalorder %s32, 0
        %p287 = pnand %p285, %p286
        %p288 = pneg %p287
        // Predicated region
        $region61: #{tpu_custom_call.1} parent=43 // pred_check
          _
        $region62: #{tpu_custom_call.1} parent=43 // pred_check_branch
          %290 = sbr.rel (%p287) target = $region64
        $region63: #{tpu_custom_call.1} parent=43 // pred_region
          $region65: #{tpu_custom_call.1} parent=63
            #allocation13 [shape = 's32[1]{0}', space=sflag, size = 0x4, scoped, tag = 'scoped memory for tpu_custom_call.1']
            // Predicated region
            $region66: #{tpu_custom_call.1} parent=65 // pred_check
              _
            $region67: #{tpu_custom_call.1} parent=65 // pred_check_branch
              %292 = sbr.rel target = $region69
            $region68: #{tpu_custom_call.1} parent=65 // pred_region
              %293 = sst [smem:[#allocation16]] [#allocation15]
              %294 = sst [smem:[#allocation17]] [#allocation14]
            $region69: #{tpu_custom_call.1} parent=65 // pred_fallthru
              _
            %296 = shalt.err (0)
            %s298 = sshll.u32 %s2, 4
            %s299 = int_to_ptr.hbm [resolvable:$true] %s298
            %s300 = sshll.u32 [#allocation2], 4
            %s301 = int_to_ptr.vmem [resolvable:$true] %s300
            %303 = dma.hbm_to_vmem [thread:$0]  %s299, 1024, %s301, [#allocation13]
            %s304 = smul.u32 4, 16
            %s305 = smul.u32 %s304, 1
            %s306 = sshll.u32 %s305, 4
            %307 = dma.done [#allocation13], %s306
        $region64: #{tpu_custom_call.1} parent=43 // pred_fallthru
          _
        // Predicated region
        $region70: #{tpu_custom_call.1} parent=43 // pred_check
          %p308 = pneg %p286
        $region71: #{tpu_custom_call.1} parent=43 // pred_check_branch
          %310 = sbr.rel (%p308) target = $region73
        $region72: #{tpu_custom_call.1} parent=43 // pred_region
          %311 = vst [vmem:[#allocation3] sm:$0xff] 0.0
          %312 = vst [vmem:[#allocation3 + $0x8] sm:$0xff] 0.0
          %313 = vst [vmem:[#allocation3 + $0x10] sm:$0xff] 0.0
          %314 = vst [vmem:[#allocation3 + $0x18] sm:$0xff] 0.0
          %315 = vst [vmem:[#allocation3 + $0x20] sm:$0xff] 0.0
          %316 = vst [vmem:[#allocation3 + $0x28] sm:$0xff] 0.0
          %317 = vst [vmem:[#allocation3 + $0x30] sm:$0xff] 0.0
          %318 = vst [vmem:[#allocation3 + $0x38] sm:$0xff] 0.0
          %319 = vst [vmem:[#allocation3 + $0x40] sm:$0xff] 0.0
          %320 = vst [vmem:[#allocation3 + $0x48] sm:$0xff] 0.0
          %321 = vst [vmem:[#allocation3 + $0x50] sm:$0xff] 0.0
          %322 = vst [vmem:[#allocation3 + $0x58] sm:$0xff] 0.0
          %323 = vst [vmem:[#allocation3 + $0x60] sm:$0xff] 0.0
          %324 = vst [vmem:[#allocation3 + $0x68] sm:$0xff] 0.0
          %325 = vst [vmem:[#allocation3 + $0x70] sm:$0xff] 0.0
          %326 = vst [vmem:[#allocation3 + $0x78] sm:$0xff] 0.0
        $region73: #{tpu_custom_call.1} parent=43 // pred_fallthru
          _
        %p327 = scmp.lt.s32.totalorder %s30, 0
        %s328 = ssub.s32 0, %s30
        %s329 = scalar_select %p327, %s328, %s30
        %s330 = sand.u32 %s329, 1
        %s331 = ssub.s32 0, %s330
        %s332 = scalar_select %p327, %s331, %s330
        %p333 = scmp.ne.s32.totalorder %s332, 0
        %p334 = scmp.lt.s32.totalorder %s332, 0
        %p335 = pnand %p334, %p333
        %p336 = pneg %p335
        %s337 = sadd.s32 %s332, 2
        %s338 = scalar_select %p336, %s337, %s332
        %s339 = smul.u32 %s32, 128
        %s340 = sshra.s32 %s339, 3
        %s341 = sand.u32 %s339, 7
        %s342 = smul.u32 %s338, 16
        %s343 = sadd.s32 %s340, %s342
        %s344 = smul.addr %s343, 4
        %s345 = scalar_lea.vmem [#allocation2], %s344
        %v346 = vld [vmem:[%s345] sm:$0xf]
        %v347 = vld [vmem:[%s345 + $0x4] sm:$0xf]
        %v348 = vld [vmem:[%s345 + $0x8] sm:$0xf]
        %v349 = vld [vmem:[%s345 + $0xc] sm:$0xf]
        %v350 = vld [vmem:[%s345 + $0x10] sm:$0xf]
        %v351 = vld [vmem:[%s345 + $0x14] sm:$0xf]
        %v352 = vld [vmem:[%s345 + $0x18] sm:$0xf]
        %v353 = vld [vmem:[%s345 + $0x1c] sm:$0xf]
        %v354 = vld [vmem:[%s345 + $0x20] sm:$0xf]
        %v355 = vld [vmem:[%s345 + $0x24] sm:$0xf]
        %v356 = vld [vmem:[%s345 + $0x28] sm:$0xf]
        %v357 = vld [vmem:[%s345 + $0x2c] sm:$0xf]
        %v358 = vld [vmem:[%s345 + $0x30] sm:$0xf]
        %v359 = vld [vmem:[%s345 + $0x34] sm:$0xf]
        %v360 = vld [vmem:[%s345 + $0x38] sm:$0xf]
        %v361 = vld [vmem:[%s345 + $0x3c] sm:$0xf]
        %v362 = vld [vmem:[#allocation3] sm:$0xff]
        %v363 = vld [vmem:[#allocation3 + $0x8] sm:$0xff]
        %v364 = vld [vmem:[#allocation3 + $0x10] sm:$0xff]
        %v365 = vld [vmem:[#allocation3 + $0x18] sm:$0xff]
        %v366 = vld [vmem:[#allocation3 + $0x20] sm:$0xff]
        %v367 = vld [vmem:[#allocation3 + $0x28] sm:$0xff]
        %v368 = vld [vmem:[#allocation3 + $0x30] sm:$0xff]
        %v369 = vld [vmem:[#allocation3 + $0x38] sm:$0xff]
        %v370 = vld [vmem:[#allocation3 + $0x40] sm:$0xff]
        %v371 = vld [vmem:[#allocation3 + $0x48] sm:$0xff]
        %v372 = vld [vmem:[#allocation3 + $0x50] sm:$0xff]
        %v373 = vld [vmem:[#allocation3 + $0x58] sm:$0xff]
        %v374 = vld [vmem:[#allocation3 + $0x60] sm:$0xff]
        %v375 = vld [vmem:[#allocation3 + $0x68] sm:$0xff]
        %v376 = vld [vmem:[#allocation3 + $0x70] sm:$0xff]
        %v377 = vld [vmem:[#allocation3 + $0x78] sm:$0xff]
        %v378 = vld [vmem:[#allocation9] sm:$0xf]
        %v379 = vld [vmem:[#allocation9 + $0x4] sm:$0xf]
        %v380 = vld [vmem:[#allocation9 + $0x8] sm:$0xf]
        %v381 = vld [vmem:[#allocation9 + $0xc] sm:$0xf]
        %v382 = vld [vmem:[#allocation9 + $0x10] sm:$0xf]
        %v383 = vld [vmem:[#allocation9 + $0x14] sm:$0xf]
        %v384 = vld [vmem:[#allocation9 + $0x18] sm:$0xf]
        %v385 = vld [vmem:[#allocation9 + $0x1c] sm:$0xf]
        %v386 = vld [vmem:[#allocation9 + $0x20] sm:$0xf]
        %v387 = vld [vmem:[#allocation9 + $0x24] sm:$0xf]
        %v388 = vld [vmem:[#allocation9 + $0x28] sm:$0xf]
        %v389 = vld [vmem:[#allocation9 + $0x2c] sm:$0xf]
        %v390 = vld [vmem:[#allocation9 + $0x30] sm:$0xf]
        %v391 = vld [vmem:[#allocation9 + $0x34] sm:$0xf]
        %v392 = vld [vmem:[#allocation9 + $0x38] sm:$0xf]
        %v393 = vld [vmem:[#allocation9 + $0x3c] sm:$0xf]
        %v410 = vunpack.c.l.b16 %v378
        %v411 = vunpack.c.l.b16 %v379
        %v412 = vunpack.c.l.b16 %v380
        %v413 = vunpack.c.l.b16 %v381
        %v414 = vunpack.c.l.b16 %v382
        %v415 = vunpack.c.l.b16 %v383
        %v416 = vunpack.c.l.b16 %v384
        %v417 = vunpack.c.l.b16 %v385
        %v418 = vunpack.c.l.b16 %v386
        %v419 = vunpack.c.l.b16 %v387
        %v420 = vunpack.c.l.b16 %v388
        %v421 = vunpack.c.l.b16 %v389
        %v422 = vunpack.c.l.b16 %v390
        %v423 = vunpack.c.l.b16 %v391
        %v424 = vunpack.c.l.b16 %v392
        %v425 = vunpack.c.l.b16 %v393
        %v426 = vpack.c.b16 %v411, %v410
        %v427 = vpack.c.b16 %v413, %v412
        %v428 = vpack.c.b16 %v415, %v414
        %v429 = vpack.c.b16 %v417, %v416
        %v430 = vpack.c.b16 %v419, %v418
        %v431 = vpack.c.b16 %v421, %v420
        %v432 = vpack.c.b16 %v423, %v422
        %v433 = vpack.c.b16 %v425, %v424
        %v458 = vunpack.c.l.b16 %v346
        %v459 = vunpack.c.l.b16 %v347
        %v460 = vunpack.c.l.b16 %v348
        %v461 = vunpack.c.l.b16 %v349
        %v462 = vunpack.c.l.b16 %v350
        %v463 = vunpack.c.l.b16 %v351
        %v464 = vunpack.c.l.b16 %v352
        %v465 = vunpack.c.l.b16 %v353
        %v466 = vunpack.c.l.b16 %v354
        %v467 = vunpack.c.l.b16 %v355
        %v468 = vunpack.c.l.b16 %v356
        %v469 = vunpack.c.l.b16 %v357
        %v470 = vunpack.c.l.b16 %v358
        %v471 = vunpack.c.l.b16 %v359
        %v472 = vunpack.c.l.b16 %v360
        %v473 = vunpack.c.l.b16 %v361
        %v474 = vpack.c.b16 %v459, %v458
        %v475 = vpack.c.b16 %v461, %v460
        %v476 = vpack.c.b16 %v463, %v462
        %v477 = vpack.c.b16 %v465, %v464
        %v478 = vpack.c.b16 %v467, %v466
        %v479 = vpack.c.b16 %v469, %v468
        %v480 = vpack.c.b16 %v471, %v470
        %v481 = vpack.c.b16 %v473, %v472
        %490 = vmatpush.bf16.msra.mxu0 %v481
        %491 = vmatpush.bf16.msra.mxu0 %v480
        %492 = vmatpush.bf16.msra.mxu0 %v479
        %493 = vmatpush.bf16.msra.mxu0 %v478
        %494 = vmatpush.bf16.msra.mxu0 %v477
        %495 = vmatpush.bf16.msra.mxu0 %v476
        %496 = vmatpush.bf16.msra.mxu0 %v475
        %497 = vmatpush.bf16.msra.mxu0 %v474
        %498 = vmatmul.bf16.gmra.mxu0 %v426
        %v499 = vpop.f32.mrf.mxu0
        %v500 = vadd.f32 0.0, %v499
        %v501 = vpop.f32.mrf.mxu0
        %v502 = vadd.f32 0.0, %v501
        %503 = vmatmul.bf16.gmra.mxu0 %v427
        %v504 = vpop.f32.mrf.mxu0
        %v505 = vadd.f32 0.0, %v504
        %v506 = vpop.f32.mrf.mxu0
        %v507 = vadd.f32 0.0, %v506
        %508 = vmatmul.bf16.gmra.mxu0 %v428
        %v509 = vpop.f32.mrf.mxu0
        %v510 = vadd.f32 0.0, %v509
        %v511 = vpop.f32.mrf.mxu0
        %v512 = vadd.f32 0.0, %v511
        %513 = vmatmul.bf16.gmra.mxu0 %v429
        %v514 = vpop.f32.mrf.mxu0
        %v515 = vadd.f32 0.0, %v514
        %v516 = vpop.f32.mrf.mxu0
        %v517 = vadd.f32 0.0, %v516
        %518 = vmatmul.bf16.gmra.mxu0 %v430
        %v519 = vpop.f32.mrf.mxu0
        %v520 = vadd.f32 0.0, %v519
        %v521 = vpop.f32.mrf.mxu0
        %v522 = vadd.f32 0.0, %v521
        %523 = vmatmul.bf16.gmra.mxu0 %v431
        %v524 = vpop.f32.mrf.mxu0
        %v525 = vadd.f32 0.0, %v524
        %v526 = vpop.f32.mrf.mxu0
        %v527 = vadd.f32 0.0, %v526
        %528 = vmatmul.bf16.gmra.mxu0 %v432
        %v529 = vpop.f32.mrf.mxu0
        %v530 = vadd.f32 0.0, %v529
        %v531 = vpop.f32.mrf.mxu0
        %v532 = vadd.f32 0.0, %v531
        %533 = vmatmul.bf16.gmra.mxu0 %v433
        %v534 = vpop.f32.mrf.mxu0
        %v535 = vadd.f32 0.0, %v534
        %v536 = vpop.f32.mrf.mxu0
        %v537 = vadd.f32 0.0, %v536
        %538 = vdwg.mxu0
        %v539 = vadd.f32 %v362, %v500
        %v540 = vadd.f32 %v363, %v502
        %v541 = vadd.f32 %v364, %v505
        %v542 = vadd.f32 %v365, %v507
        %v543 = vadd.f32 %v366, %v510
        %v544 = vadd.f32 %v367, %v512
        %v545 = vadd.f32 %v368, %v515
        %v546 = vadd.f32 %v369, %v517
        %v547 = vadd.f32 %v370, %v520
        %v548 = vadd.f32 %v371, %v522
        %v549 = vadd.f32 %v372, %v525
        %v550 = vadd.f32 %v373, %v527
        %v551 = vadd.f32 %v374, %v530
        %v552 = vadd.f32 %v375, %v532
        %v553 = vadd.f32 %v376, %v535
        %v554 = vadd.f32 %v377, %v537
        %555 = vst [vmem:[#allocation3] sm:$0xff] %v539
        %556 = vst [vmem:[#allocation3 + $0x8] sm:$0xff] %v540
        %557 = vst [vmem:[#allocation3 + $0x10] sm:$0xff] %v541
        %558 = vst [vmem:[#allocation3 + $0x18] sm:$0xff] %v542
        %559 = vst [vmem:[#allocation3 + $0x20] sm:$0xff] %v543
        %560 = vst [vmem:[#allocation3 + $0x28] sm:$0xff] %v544
        %561 = vst [vmem:[#allocation3 + $0x30] sm:$0xff] %v545
        %562 = vst [vmem:[#allocation3 + $0x38] sm:$0xff] %v546
        %563 = vst [vmem:[#allocation3 + $0x40] sm:$0xff] %v547
        %564 = vst [vmem:[#allocation3 + $0x48] sm:$0xff] %v548
        %565 = vst [vmem:[#allocation3 + $0x50] sm:$0xff] %v549
        %566 = vst [vmem:[#allocation3 + $0x58] sm:$0xff] %v550
        %567 = vst [vmem:[#allocation3 + $0x60] sm:$0xff] %v551
        %568 = vst [vmem:[#allocation3 + $0x68] sm:$0xff] %v552
        %569 = vst [vmem:[#allocation3 + $0x70] sm:$0xff] %v553
        %570 = vst [vmem:[#allocation3 + $0x78] sm:$0xff] %v554
        // Predicated region
        $region74: #{tpu_custom_call.1} parent=43 // pred_check
          %p571 = pneg %p286
        $region75: #{tpu_custom_call.1} parent=43 // pred_check_branch
          %573 = sbr.rel (%p571) target = $region77
        $region76: #{tpu_custom_call.1} parent=43 // pred_region
          %s574 = smul.u32 %s31, 128
          %s575 = sshra.s32 %s574, 3
          %s576 = sand.u32 %s574, 7
          %s577 = sadd.s32 %s575, %s342
          %s578 = smul.addr %s577, 4
          %s579 = scalar_lea.vmem [#allocation2], %s578
          %v580 = vld [vmem:[%s579] sm:$0xf]
          %v581 = vld [vmem:[%s579 + $0x4] sm:$0xf]
          %v582 = vld [vmem:[%s579 + $0x8] sm:$0xf]
          %v583 = vld [vmem:[%s579 + $0xc] sm:$0xf]
          %v584 = vld [vmem:[%s579 + $0x10] sm:$0xf]
          %v585 = vld [vmem:[%s579 + $0x14] sm:$0xf]
          %v586 = vld [vmem:[%s579 + $0x18] sm:$0xf]
          %v587 = vld [vmem:[%s579 + $0x1c] sm:$0xf]
          %v588 = vld [vmem:[%s579 + $0x20] sm:$0xf]
          %v589 = vld [vmem:[%s579 + $0x24] sm:$0xf]
          %v590 = vld [vmem:[%s579 + $0x28] sm:$0xf]
          %v591 = vld [vmem:[%s579 + $0x2c] sm:$0xf]
          %v592 = vld [vmem:[%s579 + $0x30] sm:$0xf]
          %v593 = vld [vmem:[%s579 + $0x34] sm:$0xf]
          %v594 = vld [vmem:[%s579 + $0x38] sm:$0xf]
          %v595 = vld [vmem:[%s579 + $0x3c] sm:$0xf]
          %v596 = vunpack.c.l.bf16 %v580
          %v597 = vunpack.c.l.bf16 %v581
          %v598 = vunpack.c.l.bf16 %v582
          %v599 = vunpack.c.l.bf16 %v583
          %v600 = vunpack.c.l.bf16 %v584
          %v601 = vunpack.c.l.bf16 %v585
          %v602 = vunpack.c.l.bf16 %v586
          %v603 = vunpack.c.l.bf16 %v587
          %v604 = vunpack.c.l.bf16 %v588
          %v605 = vunpack.c.l.bf16 %v589
          %v606 = vunpack.c.l.bf16 %v590
          %v607 = vunpack.c.l.bf16 %v591
          %v608 = vunpack.c.l.bf16 %v592
          %v609 = vunpack.c.l.bf16 %v593
          %v610 = vunpack.c.l.bf16 %v594
          %v611 = vunpack.c.l.bf16 %v595
          %s612 = sld [smem:[#allocation6 + %s30]]
          %s613 = sadd.f32 %s612, 1.0
          %v614 = vstv %s613
          %v615 = vmul.f32 %v614, %v596
          %v616 = vmul.f32 %v614, %v597
          %v617 = vmul.f32 %v614, %v598
          %v618 = vmul.f32 %v614, %v599
          %v619 = vmul.f32 %v614, %v600
          %v620 = vmul.f32 %v614, %v601
          %v621 = vmul.f32 %v614, %v602
          %v622 = vmul.f32 %v614, %v603
          %v623 = vmul.f32 %v614, %v604
          %v624 = vmul.f32 %v614, %v605
          %v625 = vmul.f32 %v614, %v606
          %v626 = vmul.f32 %v614, %v607
          %v627 = vmul.f32 %v614, %v608
          %v628 = vmul.f32 %v614, %v609
          %v629 = vmul.f32 %v614, %v610
          %v630 = vmul.f32 %v614, %v611
          %v631 = vld [vmem:[#allocation3] sm:$0xff]
          %v632 = vld [vmem:[#allocation3 + $0x8] sm:$0xff]
          %v633 = vld [vmem:[#allocation3 + $0x10] sm:$0xff]
          %v634 = vld [vmem:[#allocation3 + $0x18] sm:$0xff]
          %v635 = vld [vmem:[#allocation3 + $0x20] sm:$0xff]
          %v636 = vld [vmem:[#allocation3 + $0x28] sm:$0xff]
          %v637 = vld [vmem:[#allocation3 + $0x30] sm:$0xff]
          %v638 = vld [vmem:[#allocation3 + $0x38] sm:$0xff]
          %v639 = vld [vmem:[#allocation3 + $0x40] sm:$0xff]
          %v640 = vld [vmem:[#allocation3 + $0x48] sm:$0xff]
          %v641 = vld [vmem:[#allocation3 + $0x50] sm:$0xff]
          %v642 = vld [vmem:[#allocation3 + $0x58] sm:$0xff]
          %v643 = vld [vmem:[#allocation3 + $0x60] sm:$0xff]
          %v644 = vld [vmem:[#allocation3 + $0x68] sm:$0xff]
          %v645 = vld [vmem:[#allocation3 + $0x70] sm:$0xff]
          %v646 = vld [vmem:[#allocation3 + $0x78] sm:$0xff]
          %v647 = vadd.f32 %v615, %v631
          %v648 = vadd.f32 %v616, %v632
          %v649 = vadd.f32 %v617, %v633
          %v650 = vadd.f32 %v618, %v634
          %v651 = vadd.f32 %v619, %v635
          %v652 = vadd.f32 %v620, %v636
          %v653 = vadd.f32 %v621, %v637
          %v654 = vadd.f32 %v622, %v638
          %v655 = vadd.f32 %v623, %v639
          %v656 = vadd.f32 %v624, %v640
          %v657 = vadd.f32 %v625, %v641
          %v658 = vadd.f32 %v626, %v642
          %v659 = vadd.f32 %v627, %v643
          %v660 = vadd.f32 %v628, %v644
          %v661 = vadd.f32 %v629, %v645
          %v662 = vadd.f32 %v630, %v646
          %v663 = vpack.c.bf16 %v648, %v647
          %v664 = vpack.c.bf16 %v650, %v649
          %v665 = vpack.c.bf16 %v652, %v651
          %v666 = vpack.c.bf16 %v654, %v653
          %v667 = vpack.c.bf16 %v656, %v655
          %v668 = vpack.c.bf16 %v658, %v657
          %v669 = vpack.c.bf16 %v660, %v659
          %v670 = vpack.c.bf16 %v662, %v661
          %v671 = vld [vmem:[%s246] sm:$0xf]
          %v672 = vld [vmem:[%s246 + $0x4] sm:$0xf]
          %v673 = vld [vmem:[%s246 + $0x8] sm:$0xf]
          %v674 = vld [vmem:[%s246 + $0xc] sm:$0xf]
          %v675 = vld [vmem:[%s246 + $0x10] sm:$0xf]
          %v676 = vld [vmem:[%s246 + $0x14] sm:$0xf]
          %v677 = vld [vmem:[%s246 + $0x18] sm:$0xf]
          %v678 = vld [vmem:[%s246 + $0x1c] sm:$0xf]
          %v679 = vld [vmem:[%s246 + $0x20] sm:$0xf]
          %v680 = vld [vmem:[%s246 + $0x24] sm:$0xf]
          %v681 = vld [vmem:[%s246 + $0x28] sm:$0xf]
          %v682 = vld [vmem:[%s246 + $0x2c] sm:$0xf]
          %v683 = vld [vmem:[%s246 + $0x30] sm:$0xf]
          %v684 = vld [vmem:[%s246 + $0x34] sm:$0xf]
          %v685 = vld [vmem:[%s246 + $0x38] sm:$0xf]
          %v686 = vld [vmem:[%s246 + $0x3c] sm:$0xf]
          %v687 = vld [vmem:[%s281] sm:$0x1]
          %v689 = vperm.slane %v687, 0
          %v707 = vunpack.c.l.b16 %v671
          %v708 = vunpack.c.l.b16 %v672
          %v709 = vunpack.c.l.b16 %v673
          %v710 = vunpack.c.l.b16 %v674
          %v711 = vunpack.c.l.b16 %v675
          %v712 = vunpack.c.l.b16 %v676
          %v713 = vunpack.c.l.b16 %v677
          %v714 = vunpack.c.l.b16 %v678
          %v715 = vunpack.c.l.b16 %v679
          %v716 = vunpack.c.l.b16 %v680
          %v717 = vunpack.c.l.b16 %v681
          %v718 = vunpack.c.l.b16 %v682
          %v719 = vunpack.c.l.b16 %v683
          %v720 = vunpack.c.l.b16 %v684
          %v721 = vunpack.c.l.b16 %v685
          %v722 = vunpack.c.l.b16 %v686
          %v723 = vpack.c.b16 %v708, %v707
          %v724 = vpack.c.b16 %v710, %v709
          %v725 = vpack.c.b16 %v712, %v711
          %v726 = vpack.c.b16 %v714, %v713
          %v727 = vpack.c.b16 %v716, %v715
          %v728 = vpack.c.b16 %v718, %v717
          %v729 = vpack.c.b16 %v720, %v719
          %v730 = vpack.c.b16 %v722, %v721
          %739 = vmatpush.bf16.msra.mxu0 %v730
          %740 = vmatpush.bf16.msra.mxu0 %v729
          %741 = vmatpush.bf16.msra.mxu0 %v728
          %742 = vmatpush.bf16.msra.mxu0 %v727
          %743 = vmatpush.bf16.msra.mxu0 %v726
          %744 = vmatpush.bf16.msra.mxu0 %v725
          %745 = vmatpush.bf16.msra.mxu0 %v724
          %746 = vmatpush.bf16.msra.mxu0 %v723
          %747 = vmatmul.bf16.gmra.mxu0 %v663
          %v748 = vpop.f32.mrf.mxu0
          %v749 = vadd.f32 %v689, %v748
          %v750 = vpop.f32.mrf.mxu0
          %v751 = vadd.f32 %v689, %v750
          %752 = vmatmul.bf16.gmra.mxu0 %v664
          %v753 = vpop.f32.mrf.mxu0
          %v754 = vadd.f32 %v689, %v753
          %v755 = vpop.f32.mrf.mxu0
          %v756 = vadd.f32 %v689, %v755
          %757 = vmatmul.bf16.gmra.mxu0 %v665
          %v758 = vpop.f32.mrf.mxu0
          %v759 = vadd.f32 %v689, %v758
          %v760 = vpop.f32.mrf.mxu0
          %v761 = vadd.f32 %v689, %v760
          %762 = vmatmul.bf16.gmra.mxu0 %v666
          %v763 = vpop.f32.mrf.mxu0
          %v764 = vadd.f32 %v689, %v763
          %v765 = vpop.f32.mrf.mxu0
          %v766 = vadd.f32 %v689, %v765
          %767 = vmatmul.bf16.gmra.mxu0 %v667
          %v768 = vpop.f32.mrf.mxu0
          %v769 = vadd.f32 %v689, %v768
          %v770 = vpop.f32.mrf.mxu0
          %v771 = vadd.f32 %v689, %v770
          %772 = vmatmul.bf16.gmra.mxu0 %v668
          %v773 = vpop.f32.mrf.mxu0
          %v774 = vadd.f32 %v689, %v773
          %v775 = vpop.f32.mrf.mxu0
          %v776 = vadd.f32 %v689, %v775
          %777 = vmatmul.bf16.gmra.mxu0 %v669
          %v778 = vpop.f32.mrf.mxu0
          %v779 = vadd.f32 %v689, %v778
          %v780 = vpop.f32.mrf.mxu0
          %v781 = vadd.f32 %v689, %v780
          %782 = vmatmul.bf16.gmra.mxu0 %v670
          %v783 = vpop.f32.mrf.mxu0
          %v784 = vadd.f32 %v689, %v783
          %v785 = vpop.f32.mrf.mxu0
          %v786 = vadd.f32 %v689, %v785
          %787 = vdwg.mxu0
          %v788 = vmax.f32 %v749, 0.0
          %v789 = vmax.f32 %v751, 0.0
          %v790 = vmax.f32 %v754, 0.0
          %v791 = vmax.f32 %v756, 0.0
          %v792 = vmax.f32 %v759, 0.0
          %v793 = vmax.f32 %v761, 0.0
          %v794 = vmax.f32 %v764, 0.0
          %v795 = vmax.f32 %v766, 0.0
          %v796 = vmax.f32 %v769, 0.0
          %v797 = vmax.f32 %v771, 0.0
          %v798 = vmax.f32 %v774, 0.0
          %v799 = vmax.f32 %v776, 0.0
          %v800 = vmax.f32 %v779, 0.0
          %v801 = vmax.f32 %v781, 0.0
          %v802 = vmax.f32 %v784, 0.0
          %v803 = vmax.f32 %v786, 0.0
          %v804 = vpack.c.bf16 %v788, %v788
          %v805 = vpack.c.bf16 %v789, %v789
          %v806 = vpack.c.bf16 %v790, %v790
          %v807 = vpack.c.bf16 %v791, %v791
          %v808 = vpack.c.bf16 %v792, %v792
          %v809 = vpack.c.bf16 %v793, %v793
          %v810 = vpack.c.bf16 %v794, %v794
          %v811 = vpack.c.bf16 %v795, %v795
          %v812 = vpack.c.bf16 %v796, %v796
          %v813 = vpack.c.bf16 %v797, %v797
          %v814 = vpack.c.bf16 %v798, %v798
          %v815 = vpack.c.bf16 %v799, %v799
          %v816 = vpack.c.bf16 %v800, %v800
          %v817 = vpack.c.bf16 %v801, %v801
          %v818 = vpack.c.bf16 %v802, %v802
          %v819 = vpack.c.bf16 %v803, %v803
          %s820 = ssub.s32 1, %s338
          %s821 = smul.u32 %s820, 16
          %s822 = sadd.s32 %s575, %s821
          %s823 = smul.addr %s822, 4
          %s824 = scalar_lea.vmem [#allocation2], %s823
          %825 = vst [vmem:[%s824] sm:$0xf] %v804
          %826 = vst [vmem:[%s824 + $0x4] sm:$0xf] %v805
          %827 = vst [vmem:[%s824 + $0x8] sm:$0xf] %v806
          %828 = vst [vmem:[%s824 + $0xc] sm:$0xf] %v807
          %829 = vst [vmem:[%s824 + $0x10] sm:$0xf] %v808
          %830 = vst [vmem:[%s824 + $0x14] sm:$0xf] %v809
          %831 = vst [vmem:[%s824 + $0x18] sm:$0xf] %v810
          %832 = vst [vmem:[%s824 + $0x1c] sm:$0xf] %v811
          %833 = vst [vmem:[%s824 + $0x20] sm:$0xf] %v812
          %834 = vst [vmem:[%s824 + $0x24] sm:$0xf] %v813
          %835 = vst [vmem:[%s824 + $0x28] sm:$0xf] %v814
          %836 = vst [vmem:[%s824 + $0x2c] sm:$0xf] %v815
          %837 = vst [vmem:[%s824 + $0x30] sm:$0xf] %v816
          %838 = vst [vmem:[%s824 + $0x34] sm:$0xf] %v817
          %839 = vst [vmem:[%s824 + $0x38] sm:$0xf] %v818
          %840 = vst [vmem:[%s824 + $0x3c] sm:$0xf] %v819
          %p841 = scmp.eq.s32.totalorder %s30, 1
          // Predicated region
          $region78: #{tpu_custom_call.1} parent=76 // pred_check
            %p842 = pneg %p841
          $region79: #{tpu_custom_call.1} parent=76 // pred_check_branch
            %844 = sbr.rel (%p842) target = $region81
          $region80: #{tpu_custom_call.1} parent=76 // pred_region
            %845 = vst [vmem:[#allocation3] sm:$0xff] %v788
            %846 = vst [vmem:[#allocation3 + $0x8] sm:$0xff] %v789
            %847 = vst [vmem:[#allocation3 + $0x10] sm:$0xff] %v790
            %848 = vst [vmem:[#allocation3 + $0x18] sm:$0xff] %v791
            %849 = vst [vmem:[#allocation3 + $0x20] sm:$0xff] %v792
            %850 = vst [vmem:[#allocation3 + $0x28] sm:$0xff] %v793
            %851 = vst [vmem:[#allocation3 + $0x30] sm:$0xff] %v794
            %852 = vst [vmem:[#allocation3 + $0x38] sm:$0xff] %v795
            %853 = vst [vmem:[#allocation3 + $0x40] sm:$0xff] %v796
            %854 = vst [vmem:[#allocation3 + $0x48] sm:$0xff] %v797
            %855 = vst [vmem:[#allocation3 + $0x50] sm:$0xff] %v798
            %856 = vst [vmem:[#allocation3 + $0x58] sm:$0xff] %v799
            %857 = vst [vmem:[#allocation3 + $0x60] sm:$0xff] %v800
            %858 = vst [vmem:[#allocation3 + $0x68] sm:$0xff] %v801
            %859 = vst [vmem:[#allocation3 + $0x70] sm:$0xff] %v802
            %860 = vst [vmem:[#allocation3 + $0x78] sm:$0xff] %v803
            $region82: #{tpu_custom_call.1} parent=80
              #allocation18 [shape = 's32[1]{0}', space=sflag, size = 0x4, scoped, tag = 'scoped memory for tpu_custom_call.1']
              %s861 = scalar_lea.hbm %s7, %s574
              // Predicated region
              $region83: #{tpu_custom_call.1} parent=82 // pred_check
                _
              $region84: #{tpu_custom_call.1} parent=82 // pred_check_branch
                %863 = sbr.rel target = $region86
              $region85: #{tpu_custom_call.1} parent=82 // pred_region
                %864 = sst [smem:[#allocation16]] [#allocation20]
                %865 = sst [smem:[#allocation17]] [#allocation19]
              $region86: #{tpu_custom_call.1} parent=82 // pred_fallthru
                _
              %867 = shalt.err (0)
              %s869 = sshll.u32 [#allocation3], 4
              %s870 = int_to_ptr.vmem [resolvable:$true] %s869
              %s871 = sshll.u32 %s861, 4
              %s872 = int_to_ptr.hbm [resolvable:$true] %s871
              %874 = dma.vmem_to_hbm [thread:$0]  %s870, 2048, %s872, [#allocation18]
              %s875 = smul.u32 128, 1
              %s876 = sshll.u32 %s875, 4
              %877 = dma.done [#allocation18], %s876
            %v878 = vld [vmem:[#allocation12] sm:$0xf]
            %v879 = vld [vmem:[#allocation12 + $0x4] sm:$0xf]
            %v880 = vld [vmem:[#allocation12 + $0x8] sm:$0xf]
            %v881 = vld [vmem:[#allocation12 + $0xc] sm:$0xf]
            %v882 = vld [vmem:[#allocation12 + $0x10] sm:$0xf]
            %v883 = vld [vmem:[#allocation12 + $0x14] sm:$0xf]
            %v884 = vld [vmem:[#allocation12 + $0x18] sm:$0xf]
            %v885 = vld [vmem:[#allocation12 + $0x1c] sm:$0xf]
            %v886 = vld [vmem:[#allocation12 + $0x20] sm:$0xf]
            %v887 = vld [vmem:[#allocation12 + $0x24] sm:$0xf]
            %v888 = vld [vmem:[#allocation12 + $0x28] sm:$0xf]
            %v889 = vld [vmem:[#allocation12 + $0x2c] sm:$0xf]
            %v890 = vld [vmem:[#allocation12 + $0x30] sm:$0xf]
            %v891 = vld [vmem:[#allocation12 + $0x34] sm:$0xf]
            %v892 = vld [vmem:[#allocation12 + $0x38] sm:$0xf]
            %v893 = vld [vmem:[#allocation12 + $0x3c] sm:$0xf]
            %v894 = vld [vmem:[%s6] sm:$0x1]
            %v896 = vperm.slane %v894, 0
            %v914 = vunpack.c.l.b16 %v804
            %v915 = vunpack.c.l.b16 %v805
            %v916 = vunpack.c.l.b16 %v806
            %v917 = vunpack.c.l.b16 %v807
            %v918 = vunpack.c.l.b16 %v808
            %v919 = vunpack.c.l.b16 %v809
            %v920 = vunpack.c.l.b16 %v810
            %v921 = vunpack.c.l.b16 %v811
            %v922 = vunpack.c.l.b16 %v812
            %v923 = vunpack.c.l.b16 %v813
            %v924 = vunpack.c.l.b16 %v814
            %v925 = vunpack.c.l.b16 %v815
            %v926 = vunpack.c.l.b16 %v816
            %v927 = vunpack.c.l.b16 %v817
            %v928 = vunpack.c.l.b16 %v818
            %v929 = vunpack.c.l.b16 %v819
            %v930 = vpack.c.b16 %v915, %v914
            %v931 = vpack.c.b16 %v917, %v916
            %v932 = vpack.c.b16 %v919, %v918
            %v933 = vpack.c.b16 %v921, %v920
            %v934 = vpack.c.b16 %v923, %v922
            %v935 = vpack.c.b16 %v925, %v924
            %v936 = vpack.c.b16 %v927, %v926
            %v937 = vpack.c.b16 %v929, %v928
            %v962 = vunpack.c.l.b16 %v878
            %v963 = vunpack.c.l.b16 %v879
            %v964 = vunpack.c.l.b16 %v880
            %v965 = vunpack.c.l.b16 %v881
            %v966 = vunpack.c.l.b16 %v882
            %v967 = vunpack.c.l.b16 %v883
            %v968 = vunpack.c.l.b16 %v884
            %v969 = vunpack.c.l.b16 %v885
            %v970 = vunpack.c.l.b16 %v886
            %v971 = vunpack.c.l.b16 %v887
            %v972 = vunpack.c.l.b16 %v888
            %v973 = vunpack.c.l.b16 %v889
            %v974 = vunpack.c.l.b16 %v890
            %v975 = vunpack.c.l.b16 %v891
            %v976 = vunpack.c.l.b16 %v892
            %v977 = vunpack.c.l.b16 %v893
            %v978 = vpack.c.b16 %v963, %v962
            %v979 = vpack.c.b16 %v965, %v964
            %v980 = vpack.c.b16 %v967, %v966
            %v981 = vpack.c.b16 %v969, %v968
            %v982 = vpack.c.b16 %v971, %v970
            %v983 = vpack.c.b16 %v973, %v972
            %v984 = vpack.c.b16 %v975, %v974
            %v985 = vpack.c.b16 %v977, %v976
            %994 = vmatpush.bf16.msra.mxu0 %v985
            %995 = vmatpush.bf16.msra.mxu0 %v984
            %996 = vmatpush.bf16.msra.mxu0 %v983
            %997 = vmatpush.bf16.msra.mxu0 %v982
            %998 = vmatpush.bf16.msra.mxu0 %v981
            %999 = vmatpush.bf16.msra.mxu0 %v980
            %1000 = vmatpush.bf16.msra.mxu0 %v979
            %1001 = vmatpush.bf16.msra.mxu0 %v978
            %1002 = vmatmul.bf16.gmra.mxu0 %v930
            %v1003 = vpop.f32.mrf.mxu0
            %v1004 = vadd.f32 %v896, %v1003
            %v1005 = vpop.f32.mrf.mxu0
            %v1006 = vadd.f32 %v896, %v1005
            %1007 = vmatmul.bf16.gmra.mxu0 %v931
            %v1008 = vpop.f32.mrf.mxu0
            %v1009 = vadd.f32 %v896, %v1008
            %v1010 = vpop.f32.mrf.mxu0
            %v1011 = vadd.f32 %v896, %v1010
            %1012 = vmatmul.bf16.gmra.mxu0 %v932
            %v1013 = vpop.f32.mrf.mxu0
            %v1014 = vadd.f32 %v896, %v1013
            %v1015 = vpop.f32.mrf.mxu0
            %v1016 = vadd.f32 %v896, %v1015
            %1017 = vmatmul.bf16.gmra.mxu0 %v933
            %v1018 = vpop.f32.mrf.mxu0
            %v1019 = vadd.f32 %v896, %v1018
            %v1020 = vpop.f32.mrf.mxu0
            %v1021 = vadd.f32 %v896, %v1020
            %1022 = vmatmul.bf16.gmra.mxu0 %v934
            %v1023 = vpop.f32.mrf.mxu0
            %v1024 = vadd.f32 %v896, %v1023
            %v1025 = vpop.f32.mrf.mxu0
            %v1026 = vadd.f32 %v896, %v1025
            %1027 = vmatmul.bf16.gmra.mxu0 %v935
            %v1028 = vpop.f32.mrf.mxu0
            %v1029 = vadd.f32 %v896, %v1028
            %v1030 = vpop.f32.mrf.mxu0
            %v1031 = vadd.f32 %v896, %v1030
            %1032 = vmatmul.bf16.gmra.mxu0 %v936
            %v1033 = vpop.f32.mrf.mxu0
            %v1034 = vadd.f32 %v896, %v1033
            %v1035 = vpop.f32.mrf.mxu0
            %v1036 = vadd.f32 %v896, %v1035
            %1037 = vmatmul.bf16.gmra.mxu0 %v937
            %v1038 = vpop.f32.mrf.mxu0
            %v1039 = vadd.f32 %v896, %v1038
            %v1040 = vpop.f32.mrf.mxu0
            %v1041 = vadd.f32 %v896, %v1040
            %1042 = vdwg.mxu0
            %1043 = vst [vmem:[#allocation4] sm:$0xff] %v1004
            %1044 = vst [vmem:[#allocation4 + $0x8] sm:$0xff] %v1006
            %1045 = vst [vmem:[#allocation4 + $0x10] sm:$0xff] %v1009
            %1046 = vst [vmem:[#allocation4 + $0x18] sm:$0xff] %v1011
            %1047 = vst [vmem:[#allocation4 + $0x20] sm:$0xff] %v1014
            %1048 = vst [vmem:[#allocation4 + $0x28] sm:$0xff] %v1016
            %1049 = vst [vmem:[#allocation4 + $0x30] sm:$0xff] %v1019
            %1050 = vst [vmem:[#allocation4 + $0x38] sm:$0xff] %v1021
            %1051 = vst [vmem:[#allocation4 + $0x40] sm:$0xff] %v1024
            %1052 = vst [vmem:[#allocation4 + $0x48] sm:$0xff] %v1026
            %1053 = vst [vmem:[#allocation4 + $0x50] sm:$0xff] %v1029
            %1054 = vst [vmem:[#allocation4 + $0x58] sm:$0xff] %v1031
            %1055 = vst [vmem:[#allocation4 + $0x60] sm:$0xff] %v1034
            %1056 = vst [vmem:[#allocation4 + $0x68] sm:$0xff] %v1036
            %1057 = vst [vmem:[#allocation4 + $0x70] sm:$0xff] %v1039
            %1058 = vst [vmem:[#allocation4 + $0x78] sm:$0xff] %v1041
            $region87: #{tpu_custom_call.1} parent=80
              #allocation21 [shape = 's32[1]{0}', space=sflag, size = 0x4, scoped, tag = 'scoped memory for tpu_custom_call.1']
              %s1059 = scalar_lea.hbm %s8, %s574
              // Predicated region
              $region88: #{tpu_custom_call.1} parent=87 // pred_check
                _
              $region89: #{tpu_custom_call.1} parent=87 // pred_check_branch
                %1061 = sbr.rel target = $region91
              $region90: #{tpu_custom_call.1} parent=87 // pred_region
                %1062 = sst [smem:[#allocation16]] [#allocation23]
                %1063 = sst [smem:[#allocation17]] [#allocation22]
              $region91: #{tpu_custom_call.1} parent=87 // pred_fallthru
                _
              %1065 = shalt.err (0)
              %s1067 = sshll.u32 [#allocation4], 4
              %s1068 = int_to_ptr.vmem [resolvable:$true] %s1067
              %s1069 = sshll.u32 %s1059, 4
              %s1070 = int_to_ptr.hbm [resolvable:$true] %s1069
              %1072 = dma.vmem_to_hbm [thread:$0]  %s1068, 2048, %s1070, [#allocation21]
              %s1073 = smul.u32 128, 1
              %s1074 = sshll.u32 %s1073, 4
              %1075 = dma.done [#allocation21], %s1074
            %v1076 = vlaneseq
            %v1077 = vand.u32 %v1076, 127
            %vm1078 = vcmp.lt.s32.totalorder %v1077, 8
            %v1079 = vsel %vm1078, %v1004, -1e+30
            %v1080 = vsel %vm1078, %v1006, -1e+30
            %v1081 = vsel %vm1078, %v1009, -1e+30
            %v1082 = vsel %vm1078, %v1011, -1e+30
            %v1083 = vsel %vm1078, %v1014, -1e+30
            %v1084 = vsel %vm1078, %v1016, -1e+30
            %v1085 = vsel %vm1078, %v1019, -1e+30
            %v1086 = vsel %vm1078, %v1021, -1e+30
            %v1087 = vsel %vm1078, %v1024, -1e+30
            %v1088 = vsel %vm1078, %v1026, -1e+30
            %v1089 = vsel %vm1078, %v1029, -1e+30
            %v1090 = vsel %vm1078, %v1031, -1e+30
            %v1091 = vsel %vm1078, %v1034, -1e+30
            %v1092 = vsel %vm1078, %v1036, -1e+30
            %v1093 = vsel %vm1078, %v1039, -1e+30
            %v1094 = vsel %vm1078, %v1041, -1e+30
            %1095 = vmax.xlane.f32.xlu0 %v1079
            %v1096 = vpop.xlane.xlu0 %1095
            %1097 = vmax.xlane.f32.xlu0 %v1080
            %v1098 = vpop.xlane.xlu0 %1097
            %1099 = vmax.xlane.f32.xlu0 %v1081
            %v1100 = vpop.xlane.xlu0 %1099
            %1101 = vmax.xlane.f32.xlu0 %v1082
            %v1102 = vpop.xlane.xlu0 %1101
            %1103 = vmax.xlane.f32.xlu0 %v1083
            %v1104 = vpop.xlane.xlu0 %1103
            %1105 = vmax.xlane.f32.xlu0 %v1084
            %v1106 = vpop.xlane.xlu0 %1105
            %1107 = vmax.xlane.f32.xlu0 %v1085
            %v1108 = vpop.xlane.xlu0 %1107
            %1109 = vmax.xlane.f32.xlu0 %v1086
            %v1110 = vpop.xlane.xlu0 %1109
            %1111 = vmax.xlane.f32.xlu0 %v1087
            %v1112 = vpop.xlane.xlu0 %1111
            %1113 = vmax.xlane.f32.xlu0 %v1088
            %v1114 = vpop.xlane.xlu0 %1113
            %1115 = vmax.xlane.f32.xlu0 %v1089
            %v1116 = vpop.xlane.xlu0 %1115
            %1117 = vmax.xlane.f32.xlu0 %v1090
            %v1118 = vpop.xlane.xlu0 %1117
            %1119 = vmax.xlane.f32.xlu0 %v1091
            %v1120 = vpop.xlane.xlu0 %1119
            %1121 = vmax.xlane.f32.xlu0 %v1092
            %v1122 = vpop.xlane.xlu0 %1121
            %1123 = vmax.xlane.f32.xlu0 %v1093
            %v1124 = vpop.xlane.xlu0 %1123
            %1125 = vmax.xlane.f32.xlu0 %v1094
            %v1126 = vpop.xlane.xlu0 %1125
            %v1127 = vsub.f32 %v1079, %v1096
            %v1128 = vsub.f32 %v1080, %v1098
            %v1129 = vsub.f32 %v1081, %v1100
            %v1130 = vsub.f32 %v1082, %v1102
            %v1131 = vsub.f32 %v1083, %v1104
            %v1132 = vsub.f32 %v1084, %v1106
            %v1133 = vsub.f32 %v1085, %v1108
            %v1134 = vsub.f32 %v1086, %v1110
            %v1135 = vsub.f32 %v1087, %v1112
            %v1136 = vsub.f32 %v1088, %v1114
            %v1137 = vsub.f32 %v1089, %v1116
            %v1138 = vsub.f32 %v1090, %v1118
            %v1139 = vsub.f32 %v1091, %v1120
            %v1140 = vsub.f32 %v1092, %v1122
            %v1141 = vsub.f32 %v1093, %v1124
            %v1142 = vsub.f32 %v1094, %v1126
            %v1143 = vmul.f32 %v1127, 1.442695
            %v1144 = vpow.pop %v1143
            %v1145 = vmul.f32 %v1128, 1.442695
            %v1146 = vpow.pop %v1145
            %v1147 = vmul.f32 %v1129, 1.442695
            %v1148 = vpow.pop %v1147
            %v1149 = vmul.f32 %v1130, 1.442695
            %v1150 = vpow.pop %v1149
            %v1151 = vmul.f32 %v1131, 1.442695
            %v1152 = vpow.pop %v1151
            %v1153 = vmul.f32 %v1132, 1.442695
            %v1154 = vpow.pop %v1153
            %v1155 = vmul.f32 %v1133, 1.442695
            %v1156 = vpow.pop %v1155
            %v1157 = vmul.f32 %v1134, 1.442695
            %v1158 = vpow.pop %v1157
            %v1159 = vmul.f32 %v1135, 1.442695
            %v1160 = vpow.pop %v1159
            %v1161 = vmul.f32 %v1136, 1.442695
            %v1162 = vpow.pop %v1161
            %v1163 = vmul.f32 %v1137, 1.442695
            %v1164 = vpow.pop %v1163
            %v1165 = vmul.f32 %v1138, 1.442695
            %v1166 = vpow.pop %v1165
            %v1167 = vmul.f32 %v1139, 1.442695
            %v1168 = vpow.pop %v1167
            %v1169 = vmul.f32 %v1140, 1.442695
            %v1170 = vpow.pop %v1169
            %v1171 = vmul.f32 %v1141, 1.442695
            %v1172 = vpow.pop %v1171
            %v1173 = vmul.f32 %v1142, 1.442695
            %v1174 = vpow.pop %v1173
            %1175 = vadd.xlane.f32.xlu0 %v1144
            %v1176 = vpop.xlane.xlu0 %1175
            %1177 = vadd.xlane.f32.xlu0 %v1146
            %v1178 = vpop.xlane.xlu0 %1177
            %1179 = vadd.xlane.f32.xlu0 %v1148
            %v1180 = vpop.xlane.xlu0 %1179
            %1181 = vadd.xlane.f32.xlu0 %v1150
            %v1182 = vpop.xlane.xlu0 %1181
            %1183 = vadd.xlane.f32.xlu0 %v1152
            %v1184 = vpop.xlane.xlu0 %1183
            %1185 = vadd.xlane.f32.xlu0 %v1154
            %v1186 = vpop.xlane.xlu0 %1185
            %1187 = vadd.xlane.f32.xlu0 %v1156
            %v1188 = vpop.xlane.xlu0 %1187
            %1189 = vadd.xlane.f32.xlu0 %v1158
            %v1190 = vpop.xlane.xlu0 %1189
            %1191 = vadd.xlane.f32.xlu0 %v1160
            %v1192 = vpop.xlane.xlu0 %1191
            %1193 = vadd.xlane.f32.xlu0 %v1162
            %v1194 = vpop.xlane.xlu0 %1193
            %1195 = vadd.xlane.f32.xlu0 %v1164
            %v1196 = vpop.xlane.xlu0 %1195
            %1197 = vadd.xlane.f32.xlu0 %v1166
            %v1198 = vpop.xlane.xlu0 %1197
            %1199 = vadd.xlane.f32.xlu0 %v1168
            %v1200 = vpop.xlane.xlu0 %1199
            %1201 = vadd.xlane.f32.xlu0 %v1170
            %v1202 = vpop.xlane.xlu0 %1201
            %1203 = vadd.xlane.f32.xlu0 %v1172
            %v1204 = vpop.xlane.xlu0 %1203
            %1205 = vadd.xlane.f32.xlu0 %v1174
            %v1206 = vpop.xlane.xlu0 %1205
            %v1207 = vrcp.pop %v1176
            %v1208 = vmul.f32 %v1176, %v1207
            %v1209 = vsub.f32 1.0, %v1208
            %v1210 = vmul.f32 %v1207, %v1209
            %v1211 = vadd.f32 %v1207, %v1210
            %vm1212 = vweird.f32 %v1176
            %vm1213 = vweird.f32 %v1207
            %vm1214 = vmor %vm1212, %vm1213
            %v1215 = vsel %vm1214, %v1207, %v1211
            %v1216 = vand.u32 2147483647, %v1176
            %vm1217 = vcmp.eq.f32.partialorder %v1216, 8.507059e+37
            %v1218 = vand.u32 %v1176, 2147483648
            %v1219 = vor.u32 1.1754944e-38, %v1218
            %v1220 = vsel %vm1217, %v1219, %v1215
            %v1221 = vmul.f32 %v1144, %v1220
            %v1222 = vrcp.pop %v1178
            %v1223 = vmul.f32 %v1178, %v1222
            %v1224 = vsub.f32 1.0, %v1223
            %v1225 = vmul.f32 %v1222, %v1224
            %v1226 = vadd.f32 %v1222, %v1225
            %vm1227 = vweird.f32 %v1178
            %vm1228 = vweird.f32 %v1222
            %vm1229 = vmor %vm1227, %vm1228
            %v1230 = vsel %vm1229, %v1222, %v1226
            %v1231 = vand.u32 2147483647, %v1178
            %vm1232 = vcmp.eq.f32.partialorder %v1231, 8.507059e+37
            %v1233 = vand.u32 %v1178, 2147483648
            %v1234 = vor.u32 1.1754944e-38, %v1233
            %v1235 = vsel %vm1232, %v1234, %v1230
            %v1236 = vmul.f32 %v1146, %v1235
            %v1237 = vrcp.pop %v1180
            %v1238 = vmul.f32 %v1180, %v1237
            %v1239 = vsub.f32 1.0, %v1238
            %v1240 = vmul.f32 %v1237, %v1239
            %v1241 = vadd.f32 %v1237, %v1240
            %vm1242 = vweird.f32 %v1180
            %vm1243 = vweird.f32 %v1237
            %vm1244 = vmor %vm1242, %vm1243
            %v1245 = vsel %vm1244, %v1237, %v1241
            %v1246 = vand.u32 2147483647, %v1180
            %vm1247 = vcmp.eq.f32.partialorder %v1246, 8.507059e+37
            %v1248 = vand.u32 %v1180, 2147483648
            %v1249 = vor.u32 1.1754944e-38, %v1248
            %v1250 = vsel %vm1247, %v1249, %v1245
            %v1251 = vmul.f32 %v1148, %v1250
            %v1252 = vrcp.pop %v1182
            %v1253 = vmul.f32 %v1182, %v1252
            %v1254 = vsub.f32 1.0, %v1253
            %v1255 = vmul.f32 %v1252, %v1254
            %v1256 = vadd.f32 %v1252, %v1255
            %vm1257 = vweird.f32 %v1182
            %vm1258 = vweird.f32 %v1252
            %vm1259 = vmor %vm1257, %vm1258
            %v1260 = vsel %vm1259, %v1252, %v1256
            %v1261 = vand.u32 2147483647, %v1182
            %vm1262 = vcmp.eq.f32.partialorder %v1261, 8.507059e+37
            %v1263 = vand.u32 %v1182, 2147483648
            %v1264 = vor.u32 1.1754944e-38, %v1263
            %v1265 = vsel %vm1262, %v1264, %v1260
            %v1266 = vmul.f32 %v1150, %v1265
            %v1267 = vrcp.pop %v1184
            %v1268 = vmul.f32 %v1184, %v1267
            %v1269 = vsub.f32 1.0, %v1268
            %v1270 = vmul.f32 %v1267, %v1269
            %v1271 = vadd.f32 %v1267, %v1270
            %vm1272 = vweird.f32 %v1184
            %vm1273 = vweird.f32 %v1267
            %vm1274 = vmor %vm1272, %vm1273
            %v1275 = vsel %vm1274, %v1267, %v1271
            %v1276 = vand.u32 2147483647, %v1184
            %vm1277 = vcmp.eq.f32.partialorder %v1276, 8.507059e+37
            %v1278 = vand.u32 %v1184, 2147483648
            %v1279 = vor.u32 1.1754944e-38, %v1278
            %v1280 = vsel %vm1277, %v1279, %v1275
            %v1281 = vmul.f32 %v1152, %v1280
            %v1282 = vrcp.pop %v1186
            %v1283 = vmul.f32 %v1186, %v1282
            %v1284 = vsub.f32 1.0, %v1283
            %v1285 = vmul.f32 %v1282, %v1284
            %v1286 = vadd.f32 %v1282, %v1285
            %vm1287 = vweird.f32 %v1186
            %vm1288 = vweird.f32 %v1282
            %vm1289 = vmor %vm1287, %vm1288
            %v1290 = vsel %vm1289, %v1282, %v1286
            %v1291 = vand.u32 2147483647, %v1186
            %vm1292 = vcmp.eq.f32.partialorder %v1291, 8.507059e+37
            %v1293 = vand.u32 %v1186, 2147483648
            %v1294 = vor.u32 1.1754944e-38, %v1293
            %v1295 = vsel %vm1292, %v1294, %v1290
            %v1296 = vmul.f32 %v1154, %v1295
            %v1297 = vrcp.pop %v1188
            %v1298 = vmul.f32 %v1188, %v1297
            %v1299 = vsub.f32 1.0, %v1298
            %v1300 = vmul.f32 %v1297, %v1299
            %v1301 = vadd.f32 %v1297, %v1300
            %vm1302 = vweird.f32 %v1188
            %vm1303 = vweird.f32 %v1297
            %vm1304 = vmor %vm1302, %vm1303
            %v1305 = vsel %vm1304, %v1297, %v1301
            %v1306 = vand.u32 2147483647, %v1188
            %vm1307 = vcmp.eq.f32.partialorder %v1306, 8.507059e+37
            %v1308 = vand.u32 %v1188, 2147483648
            %v1309 = vor.u32 1.1754944e-38, %v1308
            %v1310 = vsel %vm1307, %v1309, %v1305
            %v1311 = vmul.f32 %v1156, %v1310
            %v1312 = vrcp.pop %v1190
            %v1313 = vmul.f32 %v1190, %v1312
            %v1314 = vsub.f32 1.0, %v1313
            %v1315 = vmul.f32 %v1312, %v1314
            %v1316 = vadd.f32 %v1312, %v1315
            %vm1317 = vweird.f32 %v1190
            %vm1318 = vweird.f32 %v1312
            %vm1319 = vmor %vm1317, %vm1318
            %v1320 = vsel %vm1319, %v1312, %v1316
            %v1321 = vand.u32 2147483647, %v1190
            %vm1322 = vcmp.eq.f32.partialorder %v1321, 8.507059e+37
            %v1323 = vand.u32 %v1190, 2147483648
            %v1324 = vor.u32 1.1754944e-38, %v1323
            %v1325 = vsel %vm1322, %v1324, %v1320
            %v1326 = vmul.f32 %v1158, %v1325
            %v1327 = vrcp.pop %v1192
            %v1328 = vmul.f32 %v1192, %v1327
            %v1329 = vsub.f32 1.0, %v1328
            %v1330 = vmul.f32 %v1327, %v1329
            %v1331 = vadd.f32 %v1327, %v1330
            %vm1332 = vweird.f32 %v1192
            %vm1333 = vweird.f32 %v1327
            %vm1334 = vmor %vm1332, %vm1333
            %v1335 = vsel %vm1334, %v1327, %v1331
            %v1336 = vand.u32 2147483647, %v1192
            %vm1337 = vcmp.eq.f32.partialorder %v1336, 8.507059e+37
            %v1338 = vand.u32 %v1192, 2147483648
            %v1339 = vor.u32 1.1754944e-38, %v1338
            %v1340 = vsel %vm1337, %v1339, %v1335
            %v1341 = vmul.f32 %v1160, %v1340
            %v1342 = vrcp.pop %v1194
            %v1343 = vmul.f32 %v1194, %v1342
            %v1344 = vsub.f32 1.0, %v1343
            %v1345 = vmul.f32 %v1342, %v1344
            %v1346 = vadd.f32 %v1342, %v1345
            %vm1347 = vweird.f32 %v1194
            %vm1348 = vweird.f32 %v1342
            %vm1349 = vmor %vm1347, %vm1348
            %v1350 = vsel %vm1349, %v1342, %v1346
            %v1351 = vand.u32 2147483647, %v1194
            %vm1352 = vcmp.eq.f32.partialorder %v1351, 8.507059e+37
            %v1353 = vand.u32 %v1194, 2147483648
            %v1354 = vor.u32 1.1754944e-38, %v1353
            %v1355 = vsel %vm1352, %v1354, %v1350
            %v1356 = vmul.f32 %v1162, %v1355
            %v1357 = vrcp.pop %v1196
            %v1358 = vmul.f32 %v1196, %v1357
            %v1359 = vsub.f32 1.0, %v1358
            %v1360 = vmul.f32 %v1357, %v1359
            %v1361 = vadd.f32 %v1357, %v1360
            %vm1362 = vweird.f32 %v1196
            %vm1363 = vweird.f32 %v1357
            %vm1364 = vmor %vm1362, %vm1363
            %v1365 = vsel %vm1364, %v1357, %v1361
            %v1366 = vand.u32 2147483647, %v1196
            %vm1367 = vcmp.eq.f32.partialorder %v1366, 8.507059e+37
            %v1368 = vand.u32 %v1196, 2147483648
            %v1369 = vor.u32 1.1754944e-38, %v1368
            %v1370 = vsel %vm1367, %v1369, %v1365
            %v1371 = vmul.f32 %v1164, %v1370
            %v1372 = vrcp.pop %v1198
            %v1373 = vmul.f32 %v1198, %v1372
            %v1374 = vsub.f32 1.0, %v1373
            %v1375 = vmul.f32 %v1372, %v1374
            %v1376 = vadd.f32 %v1372, %v1375
            %vm1377 = vweird.f32 %v1198
            %vm1378 = vweird.f32 %v1372
            %vm1379 = vmor %vm1377, %vm1378
            %v1380 = vsel %vm1379, %v1372, %v1376
            %v1381 = vand.u32 2147483647, %v1198
            %vm1382 = vcmp.eq.f32.partialorder %v1381, 8.507059e+37
            %v1383 = vand.u32 %v1198, 2147483648
            %v1384 = vor.u32 1.1754944e-38, %v1383
            %v1385 = vsel %vm1382, %v1384, %v1380
            %v1386 = vmul.f32 %v1166, %v1385
            %v1387 = vrcp.pop %v1200
            %v1388 = vmul.f32 %v1200, %v1387
            %v1389 = vsub.f32 1.0, %v1388
            %v1390 = vmul.f32 %v1387, %v1389
            %v1391 = vadd.f32 %v1387, %v1390
            %vm1392 = vweird.f32 %v1200
            %vm1393 = vweird.f32 %v1387
            %vm1394 = vmor %vm1392, %vm1393
            %v1395 = vsel %vm1394, %v1387, %v1391
            %v1396 = vand.u32 2147483647, %v1200
            %vm1397 = vcmp.eq.f32.partialorder %v1396, 8.507059e+37
            %v1398 = vand.u32 %v1200, 2147483648
            %v1399 = vor.u32 1.1754944e-38, %v1398
            %v1400 = vsel %vm1397, %v1399, %v1395
            %v1401 = vmul.f32 %v1168, %v1400
            %v1402 = vrcp.pop %v1202
            %v1403 = vmul.f32 %v1202, %v1402
            %v1404 = vsub.f32 1.0, %v1403
            %v1405 = vmul.f32 %v1402, %v1404
            %v1406 = vadd.f32 %v1402, %v1405
            %vm1407 = vweird.f32 %v1202
            %vm1408 = vweird.f32 %v1402
            %vm1409 = vmor %vm1407, %vm1408
            %v1410 = vsel %vm1409, %v1402, %v1406
            %v1411 = vand.u32 2147483647, %v1202
            %vm1412 = vcmp.eq.f32.partialorder %v1411, 8.507059e+37
            %v1413 = vand.u32 %v1202, 2147483648
            %v1414 = vor.u32 1.1754944e-38, %v1413
            %v1415 = vsel %vm1412, %v1414, %v1410
            %v1416 = vmul.f32 %v1170, %v1415
            %v1417 = vrcp.pop %v1204
            %v1418 = vmul.f32 %v1204, %v1417
            %v1419 = vsub.f32 1.0, %v1418
            %v1420 = vmul.f32 %v1417, %v1419
            %v1421 = vadd.f32 %v1417, %v1420
            %vm1422 = vweird.f32 %v1204
            %vm1423 = vweird.f32 %v1417
            %vm1424 = vmor %vm1422, %vm1423
            %v1425 = vsel %vm1424, %v1417, %v1421
            %v1426 = vand.u32 2147483647, %v1204
            %vm1427 = vcmp.eq.f32.partialorder %v1426, 8.507059e+37
            %v1428 = vand.u32 %v1204, 2147483648
            %v1429 = vor.u32 1.1754944e-38, %v1428
            %v1430 = vsel %vm1427, %v1429, %v1425
            %v1431 = vmul.f32 %v1172, %v1430
            %v1432 = vrcp.pop %v1206
            %v1433 = vmul.f32 %v1206, %v1432
            %v1434 = vsub.f32 1.0, %v1433
            %v1435 = vmul.f32 %v1432, %v1434
            %v1436 = vadd.f32 %v1432, %v1435
            %vm1437 = vweird.f32 %v1206
            %vm1438 = vweird.f32 %v1432
            %vm1439 = vmor %vm1437, %vm1438
            %v1440 = vsel %vm1439, %v1432, %v1436
            %v1441 = vand.u32 2147483647, %v1206
            %vm1442 = vcmp.eq.f32.partialorder %v1441, 8.507059e+37
            %v1443 = vand.u32 %v1206, 2147483648
            %v1444 = vor.u32 1.1754944e-38, %v1443
            %v1445 = vsel %vm1442, %v1444, %v1440
            %v1446 = vmul.f32 %v1174, %v1445
            %1447 = vst [vmem:[#allocation5] sm:$0xff] %v1221
            %1448 = vst [vmem:[#allocation5 + $0x8] sm:$0xff] %v1236
            %1449 = vst [vmem:[#allocation5 + $0x10] sm:$0xff] %v1251
            %1450 = vst [vmem:[#allocation5 + $0x18] sm:$0xff] %v1266
            %1451 = vst [vmem:[#allocation5 + $0x20] sm:$0xff] %v1281
            %1452 = vst [vmem:[#allocation5 + $0x28] sm:$0xff] %v1296
            %1453 = vst [vmem:[#allocation5 + $0x30] sm:$0xff] %v1311
            %1454 = vst [vmem:[#allocation5 + $0x38] sm:$0xff] %v1326
            %1455 = vst [vmem:[#allocation5 + $0x40] sm:$0xff] %v1341
            %1456 = vst [vmem:[#allocation5 + $0x48] sm:$0xff] %v1356
            %1457 = vst [vmem:[#allocation5 + $0x50] sm:$0xff] %v1371
            %1458 = vst [vmem:[#allocation5 + $0x58] sm:$0xff] %v1386
            %1459 = vst [vmem:[#allocation5 + $0x60] sm:$0xff] %v1401
            %1460 = vst [vmem:[#allocation5 + $0x68] sm:$0xff] %v1416
            %1461 = vst [vmem:[#allocation5 + $0x70] sm:$0xff] %v1431
            %1462 = vst [vmem:[#allocation5 + $0x78] sm:$0xff] %v1446
            $region92: #{tpu_custom_call.1} parent=80
              #allocation24 [shape = 's32[1]{0}', space=sflag, size = 0x4, scoped, tag = 'scoped memory for tpu_custom_call.1']
              %s1463 = scalar_lea.hbm %s9, %s574
              // Predicated region
              $region93: #{tpu_custom_call.1} parent=92 // pred_check
                _
              $region94: #{tpu_custom_call.1} parent=92 // pred_check_branch
                %1465 = sbr.rel target = $region96
              $region95: #{tpu_custom_call.1} parent=92 // pred_region
                %1466 = sst [smem:[#allocation16]] [#allocation26]
                %1467 = sst [smem:[#allocation17]] [#allocation25]
              $region96: #{tpu_custom_call.1} parent=92 // pred_fallthru
                _
              %1469 = shalt.err (0)
              %s1471 = sshll.u32 [#allocation5], 4
              %s1472 = int_to_ptr.vmem [resolvable:$true] %s1471
              %s1473 = sshll.u32 %s1463, 4
              %s1474 = int_to_ptr.hbm [resolvable:$true] %s1473
              %1476 = dma.vmem_to_hbm [thread:$0]  %s1472, 2048, %s1474, [#allocation24]
              %s1477 = smul.u32 128, 1
              %s1478 = sshll.u32 %s1477, 4
              %1479 = dma.done [#allocation24], %s1478
          $region81: #{tpu_custom_call.1} parent=76 // pred_fallthru
            _
        $region77: #{tpu_custom_call.1} parent=43 // pred_fallthru
          _
      $region44: #{tpu_custom_call.1} parent=5 // pred_fallthru
        _
    $region6: #{tpu_custom_call.1} parent=1 // loop_footer
      %s25 = sadd.s32 1, %s21
    $region7: #{tpu_custom_call.1} parent=1 // loop_footer_branch
      %20 = sbr.rel target = $region3
    $region8: #{tpu_custom_call.1} parent=1 // loop_exit
      _
    %1480 = vsyncpa [#allocation7], 1
    %s1481 = scalar_lea.sflag [#allocation7], 1
    %1482 = vsyncpa %s1481, 1
    %1483 = vsyncpa [#allocation11], 1
    %s1484 = scalar_lea.sflag [#allocation11], 1
    %1485 = vsyncpa %s1484, 1
    %1486 = vsyncpa [#allocation8], 1
    %s1487 = scalar_lea.sflag [#allocation8], 1
    %1488 = vsyncpa %s1487, 1

</llo_original>
